<compile_context>
chip_gen: v6e
topology: v6e:2x2x1
jax: 0.10.0
libtpu: 0.0.40
codegen_flags: <defaults>
</compile_context>

<pallas_src>
import functools

import jax
import jax.numpy as jnp
from jax.experimental import pallas as pl
from jax.experimental.pallas import tpu as pltpu


def rnn_kernel(x_ref, *refs, num_layers, t_chunk, unroll):
    """One batch-tile of the full multi-layer relu-RNN + final Linear.

    x_ref    : (T, TB, I)  bf16    time-major input tile
    w_ih0    : (I, H)      bf16    layer-0 input->hidden weight (transposed)
    w_ihr    : (L-1, H, H) bf16    layers>=1 input->hidden weights (only if L>1)
    w_hh     : (L, H, H)   bf16    hidden->hidden weights (transposed)
    b        : (L, 1, H)   f32     combined bias (b_ih + b_hh)
    fc_w     : (H, O)      bf16    final linear weight (transposed)
    fc_b     : (1, O)      f32     final linear bias
    out      : (TB, O)     f32     fc(last-layer hidden at final timestep)
    hs       : (T, TB, H)  bf16    scratch: pre-activations, then hidden sequence
    """
    if num_layers > 1:
        (w_ih0_ref, w_ihr_ref, w_hh_ref, b_ref,
         fcw_ref, fcb_ref, out_ref, hs_ref) = refs
    else:
        (w_ih0_ref, w_hh_ref, b_ref,
         fcw_ref, fcb_ref, out_ref, hs_ref) = refs
        w_ihr_ref = None

    T, TB, I = x_ref.shape
    H = w_hh_ref.shape[-1]
    L = num_layers
    sdt = hs_ref.dtype  # storage / MXU-operand dtype (bfloat16)
    f32 = jnp.float32

    h_last = None
    for l in range(L):  # static unroll over layers (num_layers is small)
        w_in = w_ih0_ref[...] if l == 0 else w_ihr_ref[l - 1]
        bias = b_ref[l]                                  # (1, H) f32

        # --- Hoisted input projection (no serial dependence on h), chunked over
        # time so the transient GEMM operands stay bounded.  In-place overwrite
        # of hs_ref is safe: the projection at time t only reads the previous
        # layer's hidden at the same t, which is consumed by this very chunk.
        for c0 in range(0, T, t_chunk):
            if l == 0:
                src = x_ref[pl.ds(c0, t_chunk)]          # (tc, TB, I) bf16
            else:
                src = hs_ref[pl.ds(c0, t_chunk)]         # (tc, TB, H) bf16
            # f32 round-trip keeps the leading-dim collapse a cheap,
            # layout-friendly reshape; re-pack to bf16 right before the MXU.
            src2d = src.astype(f32).reshape(t_chunk * TB, src.shape[-1]).astype(sdt)
            pre = jnp.dot(src2d, w_in, preferred_element_type=f32) + bias
            hs_ref[pl.ds(c0, t_chunk)] = pre.reshape(t_chunk, TB, H).astype(sdt)

        w_hh_l = w_hh_ref[l]          # loaded once per layer, resident in the loop
        write_seq = l < L - 1         # last layer's sequence is never re-read

        # t = 0: h_{-1} == 0, skip the recurrent matmul entirely.
        h0 = jnp.maximum(hs_ref[0].astype(f32), 0.0)     # running h stays f32
        if write_seq:
            hs_ref[0] = h0.astype(sdt)

        def step(t, h, w_hh_l=w_hh_l, write_seq=write_seq):
            rec = jnp.dot(h.astype(sdt), w_hh_l, preferred_element_type=f32)
            h_new = jnp.maximum(hs_ref[t].astype(f32) + rec, 0.0)   # relu, f32
            if write_seq:
                hs_ref[t] = h_new.astype(sdt)            # next layer's input at t
            return h_new

        # Serial recurrence: only the (TB,H)x(H,H) matmul per step remains.
        h_last = jax.lax.fori_loop(1, T, step, h0, unroll=unroll)
        # nn.RNN inter-layer dropout is train-mode only; eval-mode no-op.

    # out = fc(out[:, -1, :])
    out_ref[...] = (jnp.dot(h_last.astype(sdt), fcw_ref[...],
                            preferred_element_type=f32)
                    + fcb_ref[...]).astype(out_ref.dtype)


def init_params(key, input_size, hidden_size, num_layers, output_size,
                param_dtype=jnp.bfloat16):
    """PyTorch-style uniform(-1/sqrt(H), 1/sqrt(H)) init, pre-transposed and
    cast to the MXU storage dtype (biases stay f32: they join the f32 accum)."""
    k = 1.0 / jnp.sqrt(jnp.float32(hidden_size))
    keys = jax.random.split(key, 4 * num_layers + 2)
    w_ih0 = None
    w_ihr, w_hh_list, b_list = [], [], []
    for l in range(num_layers):
        in_dim = input_size if l == 0 else hidden_size
        w_ih = jax.random.uniform(keys[4 * l + 0], (hidden_size, in_dim),
                                  jnp.float32, -k, k)
        w_hh = jax.random.uniform(keys[4 * l + 1], (hidden_size, hidden_size),
                                  jnp.float32, -k, k)
        b_ih = jax.random.uniform(keys[4 * l + 2], (hidden_size,),
                                  jnp.float32, -k, k)
        b_hh = jax.random.uniform(keys[4 * l + 3], (hidden_size,),
                                  jnp.float32, -k, k)
        if l == 0:
            w_ih0 = w_ih.T.astype(param_dtype)            # (I, H)
        else:
            w_ihr.append(w_ih.T.astype(param_dtype))      # (H, H)
        w_hh_list.append(w_hh.T.astype(param_dtype))      # (H, H)
        b_list.append((b_ih + b_hh)[None, :])             # (1, H) f32
    fc_w = jax.random.uniform(keys[-2], (output_size, hidden_size),
                              jnp.float32, -k, k)
    fc_b = jax.random.uniform(keys[-1], (output_size,), jnp.float32, -k, k)
    params = dict(
        w_ih0=w_ih0,                                      # (I, H)   bf16
        w_hh=jnp.stack(w_hh_list),                        # (L, H, H) bf16
        b=jnp.stack(b_list),                              # (L, 1, H) f32
        fc_w=fc_w.T.astype(param_dtype),                  # (H, O)   bf16
        fc_b=fc_b[None, :],                               # (1, O)   f32
        num_layers=num_layers,
    )
    if num_layers > 1:
        params["w_ih_rest"] = jnp.stack(w_ihr)            # (L-1, H, H) bf16
    return params


def _round_up(a, m):
    return -(-a // m) * m


def _vmem_capacity_bytes():
    try:
        return int(pltpu.get_tpu_info().vmem_capacity_bytes)
    except Exception:
        return 64 << 20   # conservative (v7x) fallback


def _tensorcores_per_chip():
    """Best-effort: chips exposing 2 TensorCores behind one device."""
    try:
        kind = jax.devices()[0].device_kind.lower()
    except Exception:
        return 1
    if any(t in kind for t in ("v4", "v5p", "v7", "7x")):
        return 2
    return 1


def _pick_t_chunk(T, TB):
    """Largest divisor of T keeping the projection-chunk ~2048 rows."""
    tc = max(1, min(T, 2048 // max(TB, 1)))
    while T % tc:
        tc -= 1
    return tc


def rnn_model_forward(x, params):
    """x: (batch, seq, input_size) f32 -> (batch, output_size) f32 (eval mode)."""
    B, T, I = x.shape
    L = int(params["num_layers"])
    H = params["w_hh"].shape[-1]
    O = params["fc_w"].shape[1]
    sdt = params["w_hh"].dtype
    sb = jnp.dtype(sdt).itemsize          # 2 for bf16
    f4 = 4
    Lr = L - 1 if L > 1 else 0

    # --- Per-generation VMEM budget (capacity minus headroom; fallback 64 MiB).
    vmem_cap = _vmem_capacity_bytes()
    budget = vmem_cap - (8 << 20)
    slack = 4 << 20                        # transient GEMM operands / Mosaic scratch
    # Weights & biases: grid-invariant but double-buffered by the default pipeline.
    fixed_bytes = 2 * ((I * H + Lr * H * H + L * H * H + H * O) * sb
                       + (L * H + O) * f4)
    # Per unit of TB: x block (bf16, x2), out block (f32, x2), merged scratch (x1).
    per_tb = 2 * T * I * sb + 2 * O * f4 + T * H * sb
    tb_budget = max(budget - fixed_bytes - slack, 0) // max(per_tb, 1)
    TB_max = int(min(512, max(8, (tb_budget // 8) * 8)))

    # --- Batch tile selection.  16-alignment keeps bf16 sublane packing clean
    # when the grid has >1 tile; a single full-batch tile is exempt.
    cores = _tensorcores_per_chip()
    B8 = _round_up(B, 8)
    if B8 <= TB_max:
        if cores >= 2 and B8 >= 32:
            TB = _round_up(-(-B8 // 2), 16)   # >=2 tiles so both TCs get work
        else:
            TB = B8                            # one tile: shortest serial chain
    else:
        TB = max(16, (TB_max // 16) * 16)
    B_pad = _round_up(B8, TB)
    grid = (B_pad // TB,)

    # --- Time-major, bf16, batch-padded input (no feature-dim padding).
    x_tm = jnp.transpose(x, (1, 0, 2)).astype(sdt)        # (T, B, I)
    if B_pad != B:
        x_tm = jnp.pad(x_tm, ((0, 0), (0, B_pad - B), (0, 0)))

    # --- VMEM limit: actual need (+slack), never above capacity - headroom.
    need = fixed_bytes + per_tb * TB + slack
    vmem_bytes = int(min(budget, max(need, 16 << 20)))

    # --- Unroll coupled to tile size (avoid vreg spills on the serial path).
    if TB <= 128:
        base_unroll = 8
    elif TB <= 256:
        base_unroll = 4
    else:
        base_unroll = 2
    unroll = True if (T - 1) <= 2 * base_unroll else base_unroll
    t_chunk = _pick_t_chunk(T, TB)

    kernel = functools.partial(rnn_kernel, num_layers=L, t_chunk=t_chunk,
                               unroll=unroll)

    in_specs = [
        pl.BlockSpec((T, TB, I), lambda i: (0, i, 0)),      # x: tile over batch
        pl.BlockSpec((I, H), lambda i: (0, 0)),             # w_ih0
    ]
    args = [x_tm, params["w_ih0"]]
    if L > 1:
        in_specs.append(pl.BlockSpec((Lr, H, H), lambda i: (0, 0, 0)))
        args.append(params["w_ih_rest"])
    in_specs += [
        pl.BlockSpec((L, H, H), lambda i: (0, 0, 0)),        # w_hh
        pl.BlockSpec((L, 1, H), lambda i: (0, 0, 0)),        # bias (f32)
        pl.BlockSpec((H, O), lambda i: (0, 0)),              # fc_w
        pl.BlockSpec((1, O), lambda i: (0, 0)),              # fc_b (f32)
    ]
    args += [params["w_hh"], params["b"], params["fc_w"], params["fc_b"]]

    out_full = pl.pallas_call(
        kernel,
        out_shape=jax.ShapeDtypeStruct((B_pad, O), jnp.float32),
        grid=grid,
        in_specs=in_specs,
        out_specs=pl.BlockSpec((TB, O), lambda i: (i, 0)),
        scratch_shapes=[pltpu.VMEM((T, TB, H), sdt)],        # merged pre/hidden seq
        compiler_params=pltpu.CompilerParams(
            dimension_semantics=("parallel",),
            vmem_limit_bytes=vmem_bytes),
    )(*args)
    return out_full[:B]


def rnn_model_reference(x, params):
    """Pure-JAX reference replicating the kernel's numerics (bf16 storage /
    MXU operands, f32 accumulation and running hidden state)."""
    B, T, I = x.shape
    L = int(params["num_layers"])
    sdt = params["w_hh"].dtype
    f32 = jnp.float32
    seq = x.astype(sdt)                                     # (B, T, Din)
    h = None
    for l in range(L):
        w_in = params["w_ih0"] if l == 0 else params["w_ih_rest"][l - 1]
        pre_seq = (jnp.einsum("bti,ih->bth", seq, w_in,
                              preferred_element_type=f32)
                   + params["b"][l]).astype(sdt)            # stored pre-activation
        h = jnp.maximum(pre_seq[:, 0].astype(f32), 0.0)
        outs = [h]
        for t in range(1, T):
            rec = jnp.dot(h.astype(sdt), params["w_hh"][l],
                          preferred_element_type=f32)
            h = jnp.maximum(pre_seq[:, t].astype(f32) + rec, 0.0)
            outs.append(h)
        seq = jnp.stack(outs, axis=1).astype(sdt)
    return jnp.dot(h.astype(sdt), params["fc_w"],
                   preferred_element_type=f32) + params["fc_b"]


if __name__ == "__main__":
    # small shapes consistent with the module's forward
    batch, seq_len = 2, 8
    input_size, hidden_size, num_layers, output_size = 4, 32, 2, 1

    key = jax.random.PRNGKey(0)
    k_x, k_p = jax.random.split(key)
    x = jax.random.normal(k_x, (batch, seq_len, input_size), jnp.float32)
    params = init_params(k_p, input_size, hidden_size, num_layers, output_size)

    out = rnn_model_forward(x, params)
    out = jax.block_until_ready(out)

    ref = rnn_model_reference(x, params)
    assert out.shape == (batch, output_size)
    assert jnp.allclose(out, ref, rtol=1e-3, atol=1e-3), (out, ref)

    print("KERNEL_OK")
</pallas_src>

<mosaic_0001>
module attributes {stable_mosaic.version = 11 : i64} {
  func.func @rnn_kernel(%arg0: i32, %arg1: memref<8x8x4xbf16, #tpu.memory_space<vmem>>, %arg2: memref<4x32xbf16, #tpu.memory_space<vmem>>, %arg3: memref<1x32x32xbf16, #tpu.memory_space<vmem>>, %arg4: memref<2x32x32xbf16, #tpu.memory_space<vmem>>, %arg5: memref<2x1x32xf32, #tpu.memory_space<vmem>>, %arg6: memref<32x1xbf16, #tpu.memory_space<vmem>>, %arg7: memref<1x1xf32, #tpu.memory_space<vmem>>, %arg8: memref<8x1xf32, #tpu.memory_space<vmem>>, %arg9: memref<8x8x32xbf16, #tpu.memory_space<vmem>>) attributes {dimension_semantics = [#tpu.dimension_semantics<parallel>], iteration_bounds = array<i64: 1>, scalar_prefetch = 0 : i64, scratch_operands = 1 : i64, tpu.core_type = #tpu.core_type<tc>, window_params = [{transform_indices = @transform_0, window_bounds = array<i64: 8, 8, 4>}, {pipeline_mode = #tpu.pipeline_mode<synchronous>, transform_indices = @transform_1, window_bounds = array<i64: 4, 32>}, {pipeline_mode = #tpu.pipeline_mode<synchronous>, transform_indices = @transform_2, window_bounds = array<i64: 1, 32, 32>}, {pipeline_mode = #tpu.pipeline_mode<synchronous>, transform_indices = @transform_3, window_bounds = array<i64: 2, 32, 32>}, {pipeline_mode = #tpu.pipeline_mode<synchronous>, transform_indices = @transform_4, window_bounds = array<i64: 2, 1, 32>}, {pipeline_mode = #tpu.pipeline_mode<synchronous>, transform_indices = @transform_5, window_bounds = array<i64: 32, 1>}, {pipeline_mode = #tpu.pipeline_mode<synchronous>, transform_indices = @transform_6, window_bounds = array<i64: 1, 1>}, {transform_indices = @transform_7, window_bounds = array<i64: 8, 1>}]} {
    %c0 = arith.constant 0 : index
    %c0_0 = arith.constant 0 : index
    %0 = vector.load %arg2[%c0, %c0_0] : memref<4x32xbf16, #tpu.memory_space<vmem>>, vector<4x32xbf16>
    %c0_1 = arith.constant 0 : index
    %c0_2 = arith.constant 0 : index
    %c0_3 = arith.constant 0 : index
    %1 = vector.load %arg5[%c0_1, %c0_2, %c0_3] : memref<2x1x32xf32, #tpu.memory_space<vmem>>, vector<1x1x32xf32>
    %2 = vector.shape_cast %1 : vector<1x1x32xf32> to vector<1x32xf32>
    %c0_4 = arith.constant 0 : index
    %c0_5 = arith.constant 0 : index
    %c0_6 = arith.constant 0 : index
    %3 = vector.load %arg1[%c0_4, %c0_5, %c0_6] : memref<8x8x4xbf16, #tpu.memory_space<vmem>>, vector<8x8x4xbf16>
    %4 = arith.extf %3 : vector<8x8x4xbf16> to vector<8x8x4xf32>
    %5 = vector.shape_cast %4 : vector<8x8x4xf32> to vector<64x4xf32>
    %6 = arith.truncf %5 : vector<64x4xf32> to vector<64x4xbf16>
    %cst = arith.constant dense<0.000000e+00> : vector<64x32xf32>
    %7 = tpu.matmul %6, %0, %cst {dimension_numbers = #tpu.dot_dimension_numbers<[1], [0], [0], [1], [0, 0, 1, 1], [], []>} : vector<64x4xbf16>, vector<4x32xbf16>, vector<64x32xf32> -> vector<64x32xf32>
    %8 = vector.broadcast %2 : vector<1x32xf32> to vector<64x32xf32>
    %9 = arith.addf %7, %8 : vector<64x32xf32>
    %10 = vector.shape_cast %9 : vector<64x32xf32> to vector<8x8x32xf32>
    %11 = arith.truncf %10 : vector<8x8x32xf32> to vector<8x8x32xbf16>
    %c0_7 = arith.constant 0 : index
    %c0_8 = arith.constant 0 : index
    %c0_9 = arith.constant 0 : index
    %12 = vector.load %arg9[%c0_7, %c0_8, %c0_9] : memref<8x8x32xbf16, #tpu.memory_space<vmem>>, vector<8x8x32xbf16>
    tpu.vector_store %arg9[%c0_7, %c0_8, %c0_9], %11 {strides = array<i32>} : memref<8x8x32xbf16, #tpu.memory_space<vmem>>, vector<8x8x32xbf16>,
    %c0_10 = arith.constant 0 : index
    %c0_11 = arith.constant 0 : index
    %c0_12 = arith.constant 0 : index
    %13 = vector.load %arg4[%c0_10, %c0_11, %c0_12] : memref<2x32x32xbf16, #tpu.memory_space<vmem>>, vector<1x32x32xbf16>
    %14 = vector.shape_cast %13 : vector<1x32x32xbf16> to vector<32x32xbf16>
    %c0_13 = arith.constant 0 : index
    %c0_14 = arith.constant 0 : index
    %c0_15 = arith.constant 0 : index
    %15 = vector.load %arg9[%c0_13, %c0_14, %c0_15] : memref<8x8x32xbf16, #tpu.memory_space<vmem>>, vector<1x8x32xbf16>
    %16 = vector.shape_cast %15 : vector<1x8x32xbf16> to vector<8x32xbf16>
    %17 = arith.extf %16 : vector<8x32xbf16> to vector<8x32xf32>
    %cst_16 = arith.constant 0.000000e+00 : f32
    %18 = vector.broadcast %cst_16 : f32 to vector<8x32xf32>
    %19 = arith.maximumf %17, %18 : vector<8x32xf32>
    %20 = arith.truncf %19 : vector<8x32xf32> to vector<8x32xbf16>
    %c0_17 = arith.constant 0 : index
    %c0_18 = arith.constant 0 : index
    %c0_19 = arith.constant 0 : index
    %21 = vector.load %arg9[%c0_17, %c0_18, %c0_19] : memref<8x8x32xbf16, #tpu.memory_space<vmem>>, vector<1x8x32xbf16>
    %22 = vector.shape_cast %21 : vector<1x8x32xbf16> to vector<8x32xbf16>
    %23 = vector.shape_cast %20 : vector<8x32xbf16> to vector<1x8x32xbf16>
    tpu.vector_store %arg9[%c0_17, %c0_18, %c0_19], %23 {strides = array<i32>} : memref<8x8x32xbf16, #tpu.memory_space<vmem>>, vector<1x8x32xbf16>,
    %c1_i32 = arith.constant 1 : i32
    %24 = arith.truncf %19 : vector<8x32xf32> to vector<8x32xbf16>
    %cst_20 = arith.constant dense<0.000000e+00> : vector<8x32xf32>
    %25 = tpu.matmul %24, %14, %cst_20 {dimension_numbers = #tpu.dot_dimension_numbers<[1], [0], [0], [1], [0, 0, 1, 1], [], []>} : vector<8x32xbf16>, vector<32x32xbf16>, vector<8x32xf32> -> vector<8x32xf32>
    %26 = arith.index_cast %c1_i32 : i32 to index
    %c0_21 = arith.constant 0 : index
    %c0_22 = arith.constant 0 : index
    %27 = vector.load %arg9[%26, %c0_21, %c0_22] : memref<8x8x32xbf16, #tpu.memory_space<vmem>>, vector<1x8x32xbf16>
    %28 = vector.shape_cast %27 : vector<1x8x32xbf16> to vector<8x32xbf16>
    %29 = arith.extf %28 : vector<8x32xbf16> to vector<8x32xf32>
    %30 = arith.addf %29, %25 : vector<8x32xf32>
    %cst_23 = arith.constant 0.000000e+00 : f32
    %31 = vector.broadcast %cst_23 : f32 to vector<8x32xf32>
    %32 = arith.maximumf %30, %31 : vector<8x32xf32>
    %33 = arith.truncf %32 : vector<8x32xf32> to vector<8x32xbf16>
    %34 = arith.index_cast %c1_i32 : i32 to index
    %c0_24 = arith.constant 0 : index
    %c0_25 = arith.constant 0 : index
    %35 = vector.load %arg9[%34, %c0_24, %c0_25] : memref<8x8x32xbf16, #tpu.memory_space<vmem>>, vector<1x8x32xbf16>
    %36 = vector.shape_cast %35 : vector<1x8x32xbf16> to vector<8x32xbf16>
    %37 = vector.shape_cast %33 : vector<8x32xbf16> to vector<1x8x32xbf16>
    tpu.vector_store %arg9[%34, %c0_24, %c0_25], %37 {strides = array<i32>} : memref<8x8x32xbf16, #tpu.memory_space<vmem>>, vector<1x8x32xbf16>,
    %c2_i32 = arith.constant 2 : i32
    %38 = arith.truncf %32 : vector<8x32xf32> to vector<8x32xbf16>
    %cst_26 = arith.constant dense<0.000000e+00> : vector<8x32xf32>
    %39 = tpu.matmul %38, %14, %cst_26 {dimension_numbers = #tpu.dot_dimension_numbers<[1], [0], [0], [1], [0, 0, 1, 1], [], []>} : vector<8x32xbf16>, vector<32x32xbf16>, vector<8x32xf32> -> vector<8x32xf32>
    %40 = arith.index_cast %c2_i32 : i32 to index
    %c0_27 = arith.constant 0 : index
    %c0_28 = arith.constant 0 : index
    %41 = vector.load %arg9[%40, %c0_27, %c0_28] : memref<8x8x32xbf16, #tpu.memory_space<vmem>>, vector<1x8x32xbf16>
    %42 = vector.shape_cast %41 : vector<1x8x32xbf16> to vector<8x32xbf16>
    %43 = arith.extf %42 : vector<8x32xbf16> to vector<8x32xf32>
    %44 = arith.addf %43, %39 : vector<8x32xf32>
    %cst_29 = arith.constant 0.000000e+00 : f32
    %45 = vector.broadcast %cst_29 : f32 to vector<8x32xf32>
    %46 = arith.maximumf %44, %45 : vector<8x32xf32>
    %47 = arith.truncf %46 : vector<8x32xf32> to vector<8x32xbf16>
    %48 = arith.index_cast %c2_i32 : i32 to index
    %c0_30 = arith.constant 0 : index
    %c0_31 = arith.constant 0 : index
    %49 = vector.load %arg9[%48, %c0_30, %c0_31] : memref<8x8x32xbf16, #tpu.memory_space<vmem>>, vector<1x8x32xbf16>
    %50 = vector.shape_cast %49 : vector<1x8x32xbf16> to vector<8x32xbf16>
    %51 = vector.shape_cast %47 : vector<8x32xbf16> to vector<1x8x32xbf16>
    tpu.vector_store %arg9[%48, %c0_30, %c0_31], %51 {strides = array<i32>} : memref<8x8x32xbf16, #tpu.memory_space<vmem>>, vector<1x8x32xbf16>,
    %c3_i32 = arith.constant 3 : i32
    %52 = arith.truncf %46 : vector<8x32xf32> to vector<8x32xbf16>
    %cst_32 = arith.constant dense<0.000000e+00> : vector<8x32xf32>
    %53 = tpu.matmul %52, %14, %cst_32 {dimension_numbers = #tpu.dot_dimension_numbers<[1], [0], [0], [1], [0, 0, 1, 1], [], []>} : vector<8x32xbf16>, vector<32x32xbf16>, vector<8x32xf32> -> vector<8x32xf32>
    %54 = arith.index_cast %c3_i32 : i32 to index
    %c0_33 = arith.constant 0 : index
    %c0_34 = arith.constant 0 : index
    %55 = vector.load %arg9[%54, %c0_33, %c0_34] : memref<8x8x32xbf16, #tpu.memory_space<vmem>>, vector<1x8x32xbf16>
    %56 = vector.shape_cast %55 : vector<1x8x32xbf16> to vector<8x32xbf16>
    %57 = arith.extf %56 : vector<8x32xbf16> to vector<8x32xf32>
    %58 = arith.addf %57, %53 : vector<8x32xf32>
    %cst_35 = arith.constant 0.000000e+00 : f32
    %59 = vector.broadcast %cst_35 : f32 to vector<8x32xf32>
    %60 = arith.maximumf %58, %59 : vector<8x32xf32>
    %61 = arith.truncf %60 : vector<8x32xf32> to vector<8x32xbf16>
    %62 = arith.index_cast %c3_i32 : i32 to index
    %c0_36 = arith.constant 0 : index
    %c0_37 = arith.constant 0 : index
    %63 = vector.load %arg9[%62, %c0_36, %c0_37] : memref<8x8x32xbf16, #tpu.memory_space<vmem>>, vector<1x8x32xbf16>
    %64 = vector.shape_cast %63 : vector<1x8x32xbf16> to vector<8x32xbf16>
    %65 = vector.shape_cast %61 : vector<8x32xbf16> to vector<1x8x32xbf16>
    tpu.vector_store %arg9[%62, %c0_36, %c0_37], %65 {strides = array<i32>} : memref<8x8x32xbf16, #tpu.memory_space<vmem>>, vector<1x8x32xbf16>,
    %c4_i32 = arith.constant 4 : i32
    %66 = arith.truncf %60 : vector<8x32xf32> to vector<8x32xbf16>
    %cst_38 = arith.constant dense<0.000000e+00> : vector<8x32xf32>
    %67 = tpu.matmul %66, %14, %cst_38 {dimension_numbers = #tpu.dot_dimension_numbers<[1], [0], [0], [1], [0, 0, 1, 1], [], []>} : vector<8x32xbf16>, vector<32x32xbf16>, vector<8x32xf32> -> vector<8x32xf32>
    %68 = arith.index_cast %c4_i32 : i32 to index
    %c0_39 = arith.constant 0 : index
    %c0_40 = arith.constant 0 : index
    %69 = vector.load %arg9[%68, %c0_39, %c0_40] : memref<8x8x32xbf16, #tpu.memory_space<vmem>>, vector<1x8x32xbf16>
    %70 = vector.shape_cast %69 : vector<1x8x32xbf16> to vector<8x32xbf16>
    %71 = arith.extf %70 : vector<8x32xbf16> to vector<8x32xf32>
    %72 = arith.addf %71, %67 : vector<8x32xf32>
    %cst_41 = arith.constant 0.000000e+00 : f32
    %73 = vector.broadcast %cst_41 : f32 to vector<8x32xf32>
    %74 = arith.maximumf %72, %73 : vector<8x32xf32>
    %75 = arith.truncf %74 : vector<8x32xf32> to vector<8x32xbf16>
    %76 = arith.index_cast %c4_i32 : i32 to index
    %c0_42 = arith.constant 0 : index
    %c0_43 = arith.constant 0 : index
    %77 = vector.load %arg9[%76, %c0_42, %c0_43] : memref<8x8x32xbf16, #tpu.memory_space<vmem>>, vector<1x8x32xbf16>
    %78 = vector.shape_cast %77 : vector<1x8x32xbf16> to vector<8x32xbf16>
    %79 = vector.shape_cast %75 : vector<8x32xbf16> to vector<1x8x32xbf16>
    tpu.vector_store %arg9[%76, %c0_42, %c0_43], %79 {strides = array<i32>} : memref<8x8x32xbf16, #tpu.memory_space<vmem>>, vector<1x8x32xbf16>,
    %c5_i32 = arith.constant 5 : i32
    %80 = arith.truncf %74 : vector<8x32xf32> to vector<8x32xbf16>
    %cst_44 = arith.constant dense<0.000000e+00> : vector<8x32xf32>
    %81 = tpu.matmul %80, %14, %cst_44 {dimension_numbers = #tpu.dot_dimension_numbers<[1], [0], [0], [1], [0, 0, 1, 1], [], []>} : vector<8x32xbf16>, vector<32x32xbf16>, vector<8x32xf32> -> vector<8x32xf32>
    %82 = arith.index_cast %c5_i32 : i32 to index
    %c0_45 = arith.constant 0 : index
    %c0_46 = arith.constant 0 : index
    %83 = vector.load %arg9[%82, %c0_45, %c0_46] : memref<8x8x32xbf16, #tpu.memory_space<vmem>>, vector<1x8x32xbf16>
    %84 = vector.shape_cast %83 : vector<1x8x32xbf16> to vector<8x32xbf16>
    %85 = arith.extf %84 : vector<8x32xbf16> to vector<8x32xf32>
    %86 = arith.addf %85, %81 : vector<8x32xf32>
    %cst_47 = arith.constant 0.000000e+00 : f32
    %87 = vector.broadcast %cst_47 : f32 to vector<8x32xf32>
    %88 = arith.maximumf %86, %87 : vector<8x32xf32>
    %89 = arith.truncf %88 : vector<8x32xf32> to vector<8x32xbf16>
    %90 = arith.index_cast %c5_i32 : i32 to index
    %c0_48 = arith.constant 0 : index
    %c0_49 = arith.constant 0 : index
    %91 = vector.load %arg9[%90, %c0_48, %c0_49] : memref<8x8x32xbf16, #tpu.memory_space<vmem>>, vector<1x8x32xbf16>
    %92 = vector.shape_cast %91 : vector<1x8x32xbf16> to vector<8x32xbf16>
    %93 = vector.shape_cast %89 : vector<8x32xbf16> to vector<1x8x32xbf16>
    tpu.vector_store %arg9[%90, %c0_48, %c0_49], %93 {strides = array<i32>} : memref<8x8x32xbf16, #tpu.memory_space<vmem>>, vector<1x8x32xbf16>,
    %c6_i32 = arith.constant 6 : i32
    %94 = arith.truncf %88 : vector<8x32xf32> to vector<8x32xbf16>
    %cst_50 = arith.constant dense<0.000000e+00> : vector<8x32xf32>
    %95 = tpu.matmul %94, %14, %cst_50 {dimension_numbers = #tpu.dot_dimension_numbers<[1], [0], [0], [1], [0, 0, 1, 1], [], []>} : vector<8x32xbf16>, vector<32x32xbf16>, vector<8x32xf32> -> vector<8x32xf32>
    %96 = arith.index_cast %c6_i32 : i32 to index
    %c0_51 = arith.constant 0 : index
    %c0_52 = arith.constant 0 : index
    %97 = vector.load %arg9[%96, %c0_51, %c0_52] : memref<8x8x32xbf16, #tpu.memory_space<vmem>>, vector<1x8x32xbf16>
    %98 = vector.shape_cast %97 : vector<1x8x32xbf16> to vector<8x32xbf16>
    %99 = arith.extf %98 : vector<8x32xbf16> to vector<8x32xf32>
    %100 = arith.addf %99, %95 : vector<8x32xf32>
    %cst_53 = arith.constant 0.000000e+00 : f32
    %101 = vector.broadcast %cst_53 : f32 to vector<8x32xf32>
    %102 = arith.maximumf %100, %101 : vector<8x32xf32>
    %103 = arith.truncf %102 : vector<8x32xf32> to vector<8x32xbf16>
    %104 = arith.index_cast %c6_i32 : i32 to index
    %c0_54 = arith.constant 0 : index
    %c0_55 = arith.constant 0 : index
    %105 = vector.load %arg9[%104, %c0_54, %c0_55] : memref<8x8x32xbf16, #tpu.memory_space<vmem>>, vector<1x8x32xbf16>
    %106 = vector.shape_cast %105 : vector<1x8x32xbf16> to vector<8x32xbf16>
    %107 = vector.shape_cast %103 : vector<8x32xbf16> to vector<1x8x32xbf16>
    tpu.vector_store %arg9[%104, %c0_54, %c0_55], %107 {strides = array<i32>} : memref<8x8x32xbf16, #tpu.memory_space<vmem>>, vector<1x8x32xbf16>,
    %c7_i32 = arith.constant 7 : i32
    %108 = arith.truncf %102 : vector<8x32xf32> to vector<8x32xbf16>
    %cst_56 = arith.constant dense<0.000000e+00> : vector<8x32xf32>
    %109 = tpu.matmul %108, %14, %cst_56 {dimension_numbers = #tpu.dot_dimension_numbers<[1], [0], [0], [1], [0, 0, 1, 1], [], []>} : vector<8x32xbf16>, vector<32x32xbf16>, vector<8x32xf32> -> vector<8x32xf32>
    %110 = arith.index_cast %c7_i32 : i32 to index
    %c0_57 = arith.constant 0 : index
    %c0_58 = arith.constant 0 : index
    %111 = vector.load %arg9[%110, %c0_57, %c0_58] : memref<8x8x32xbf16, #tpu.memory_space<vmem>>, vector<1x8x32xbf16>
    %112 = vector.shape_cast %111 : vector<1x8x32xbf16> to vector<8x32xbf16>
    %113 = arith.extf %112 : vector<8x32xbf16> to vector<8x32xf32>
    %114 = arith.addf %113, %109 : vector<8x32xf32>
    %cst_59 = arith.constant 0.000000e+00 : f32
    %115 = vector.broadcast %cst_59 : f32 to vector<8x32xf32>
    %116 = arith.maximumf %114, %115 : vector<8x32xf32>
    %117 = arith.truncf %116 : vector<8x32xf32> to vector<8x32xbf16>
    %118 = arith.index_cast %c7_i32 : i32 to index
    %c0_60 = arith.constant 0 : index
    %c0_61 = arith.constant 0 : index
    %119 = vector.load %arg9[%118, %c0_60, %c0_61] : memref<8x8x32xbf16, #tpu.memory_space<vmem>>, vector<1x8x32xbf16>
    %120 = vector.shape_cast %119 : vector<1x8x32xbf16> to vector<8x32xbf16>
    %121 = vector.shape_cast %117 : vector<8x32xbf16> to vector<1x8x32xbf16>
    tpu.vector_store %arg9[%118, %c0_60, %c0_61], %121 {strides = array<i32>} : memref<8x8x32xbf16, #tpu.memory_space<vmem>>, vector<1x8x32xbf16>,
    %c7_i32_62 = arith.constant 7 : i32
    %c0_63 = arith.constant 0 : index
    %c0_64 = arith.constant 0 : index
    %c0_65 = arith.constant 0 : index
    %122 = vector.load %arg3[%c0_63, %c0_64, %c0_65] : memref<1x32x32xbf16, #tpu.memory_space<vmem>>, vector<1x32x32xbf16>
    %123 = vector.shape_cast %122 : vector<1x32x32xbf16> to vector<32x32xbf16>
    %c1 = arith.constant 1 : index
    %c0_66 = arith.constant 0 : index
    %c0_67 = arith.constant 0 : index
    %124 = vector.load %arg5[%c1, %c0_66, %c0_67] : memref<2x1x32xf32, #tpu.memory_space<vmem>>, vector<1x1x32xf32>
    %125 = vector.shape_cast %124 : vector<1x1x32xf32> to vector<1x32xf32>
    %c0_68 = arith.constant 0 : index
    %c0_69 = arith.constant 0 : index
    %c0_70 = arith.constant 0 : index
    %126 = vector.load %arg9[%c0_68, %c0_69, %c0_70] : memref<8x8x32xbf16, #tpu.memory_space<vmem>>, vector<8x8x32xbf16>
    %127 = arith.extf %126 : vector<8x8x32xbf16> to vector<8x8x32xf32>
    %128 = vector.shape_cast %127 : vector<8x8x32xf32> to vector<64x32xf32>
    %129 = arith.truncf %128 : vector<64x32xf32> to vector<64x32xbf16>
    %cst_71 = arith.constant dense<0.000000e+00> : vector<64x32xf32>
    %130 = tpu.matmul %129, %123, %cst_71 {dimension_numbers = #tpu.dot_dimension_numbers<[1], [0], [0], [1], [0, 0, 1, 1], [], []>} : vector<64x32xbf16>, vector<32x32xbf16>, vector<64x32xf32> -> vector<64x32xf32>
    %131 = vector.broadcast %125 : vector<1x32xf32> to vector<64x32xf32>
    %132 = arith.addf %130, %131 : vector<64x32xf32>
    %133 = vector.shape_cast %132 : vector<64x32xf32> to vector<8x8x32xf32>
    %134 = arith.truncf %133 : vector<8x8x32xf32> to vector<8x8x32xbf16>
    %c0_72 = arith.constant 0 : index
    %c0_73 = arith.constant 0 : index
    %c0_74 = arith.constant 0 : index
    %135 = vector.load %arg9[%c0_72, %c0_73, %c0_74] : memref<8x8x32xbf16, #tpu.memory_space<vmem>>, vector<8x8x32xbf16>
    tpu.vector_store %arg9[%c0_72, %c0_73, %c0_74], %134 {strides = array<i32>} : memref<8x8x32xbf16, #tpu.memory_space<vmem>>, vector<8x8x32xbf16>,
    %c1_75 = arith.constant 1 : index
    %c0_76 = arith.constant 0 : index
    %c0_77 = arith.constant 0 : index
    %136 = vector.load %arg4[%c1_75, %c0_76, %c0_77] : memref<2x32x32xbf16, #tpu.memory_space<vmem>>, vector<1x32x32xbf16>
    %137 = vector.shape_cast %136 : vector<1x32x32xbf16> to vector<32x32xbf16>
    %c0_78 = arith.constant 0 : index
    %c0_79 = arith.constant 0 : index
    %c0_80 = arith.constant 0 : index
    %138 = vector.load %arg9[%c0_78, %c0_79, %c0_80] : memref<8x8x32xbf16, #tpu.memory_space<vmem>>, vector<1x8x32xbf16>
    %139 = vector.shape_cast %138 : vector<1x8x32xbf16> to vector<8x32xbf16>
    %140 = arith.extf %139 : vector<8x32xbf16> to vector<8x32xf32>
    %cst_81 = arith.constant 0.000000e+00 : f32
    %141 = vector.broadcast %cst_81 : f32 to vector<8x32xf32>
    %142 = arith.maximumf %140, %141 : vector<8x32xf32>
    %c1_i32_82 = arith.constant 1 : i32
    %143 = arith.truncf %142 : vector<8x32xf32> to vector<8x32xbf16>
    %cst_83 = arith.constant dense<0.000000e+00> : vector<8x32xf32>
    %144 = tpu.matmul %143, %137, %cst_83 {dimension_numbers = #tpu.dot_dimension_numbers<[1], [0], [0], [1], [0, 0, 1, 1], [], []>} : vector<8x32xbf16>, vector<32x32xbf16>, vector<8x32xf32> -> vector<8x32xf32>
    %145 = arith.index_cast %c1_i32_82 : i32 to index
    %c0_84 = arith.constant 0 : index
    %c0_85 = arith.constant 0 : index
    %146 = vector.load %arg9[%145, %c0_84, %c0_85] : memref<8x8x32xbf16, #tpu.memory_space<vmem>>, vector<1x8x32xbf16>
    %147 = vector.shape_cast %146 : vector<1x8x32xbf16> to vector<8x32xbf16>
    %148 = arith.extf %147 : vector<8x32xbf16> to vector<8x32xf32>
    %149 = arith.addf %148, %144 : vector<8x32xf32>
    %cst_86 = arith.constant 0.000000e+00 : f32
    %150 = vector.broadcast %cst_86 : f32 to vector<8x32xf32>
    %151 = arith.maximumf %149, %150 : vector<8x32xf32>
    %c2_i32_87 = arith.constant 2 : i32
    %152 = arith.truncf %151 : vector<8x32xf32> to vector<8x32xbf16>
    %cst_88 = arith.constant dense<0.000000e+00> : vector<8x32xf32>
    %153 = tpu.matmul %152, %137, %cst_88 {dimension_numbers = #tpu.dot_dimension_numbers<[1], [0], [0], [1], [0, 0, 1, 1], [], []>} : vector<8x32xbf16>, vector<32x32xbf16>, vector<8x32xf32> -> vector<8x32xf32>
    %154 = arith.index_cast %c2_i32_87 : i32 to index
    %c0_89 = arith.constant 0 : index
    %c0_90 = arith.constant 0 : index
    %155 = vector.load %arg9[%154, %c0_89, %c0_90] : memref<8x8x32xbf16, #tpu.memory_space<vmem>>, vector<1x8x32xbf16>
    %156 = vector.shape_cast %155 : vector<1x8x32xbf16> to vector<8x32xbf16>
    %157 = arith.extf %156 : vector<8x32xbf16> to vector<8x32xf32>
    %158 = arith.addf %157, %153 : vector<8x32xf32>
    %cst_91 = arith.constant 0.000000e+00 : f32
    %159 = vector.broadcast %cst_91 : f32 to vector<8x32xf32>
    %160 = arith.maximumf %158, %159 : vector<8x32xf32>
    %c3_i32_92 = arith.constant 3 : i32
    %161 = arith.truncf %160 : vector<8x32xf32> to vector<8x32xbf16>
    %cst_93 = arith.constant dense<0.000000e+00> : vector<8x32xf32>
    %162 = tpu.matmul %161, %137, %cst_93 {dimension_numbers = #tpu.dot_dimension_numbers<[1], [0], [0], [1], [0, 0, 1, 1], [], []>} : vector<8x32xbf16>, vector<32x32xbf16>, vector<8x32xf32> -> vector<8x32xf32>
    %163 = arith.index_cast %c3_i32_92 : i32 to index
    %c0_94 = arith.constant 0 : index
    %c0_95 = arith.constant 0 : index
    %164 = vector.load %arg9[%163, %c0_94, %c0_95] : memref<8x8x32xbf16, #tpu.memory_space<vmem>>, vector<1x8x32xbf16>
    %165 = vector.shape_cast %164 : vector<1x8x32xbf16> to vector<8x32xbf16>
    %166 = arith.extf %165 : vector<8x32xbf16> to vector<8x32xf32>
    %167 = arith.addf %166, %162 : vector<8x32xf32>
    %cst_96 = arith.constant 0.000000e+00 : f32
    %168 = vector.broadcast %cst_96 : f32 to vector<8x32xf32>
    %169 = arith.maximumf %167, %168 : vector<8x32xf32>
    %c4_i32_97 = arith.constant 4 : i32
    %170 = arith.truncf %169 : vector<8x32xf32> to vector<8x32xbf16>
    %cst_98 = arith.constant dense<0.000000e+00> : vector<8x32xf32>
    %171 = tpu.matmul %170, %137, %cst_98 {dimension_numbers = #tpu.dot_dimension_numbers<[1], [0], [0], [1], [0, 0, 1, 1], [], []>} : vector<8x32xbf16>, vector<32x32xbf16>, vector<8x32xf32> -> vector<8x32xf32>
    %172 = arith.index_cast %c4_i32_97 : i32 to index
    %c0_99 = arith.constant 0 : index
    %c0_100 = arith.constant 0 : index
    %173 = vector.load %arg9[%172, %c0_99, %c0_100] : memref<8x8x32xbf16, #tpu.memory_space<vmem>>, vector<1x8x32xbf16>
    %174 = vector.shape_cast %173 : vector<1x8x32xbf16> to vector<8x32xbf16>
    %175 = arith.extf %174 : vector<8x32xbf16> to vector<8x32xf32>
    %176 = arith.addf %175, %171 : vector<8x32xf32>
    %cst_101 = arith.constant 0.000000e+00 : f32
    %177 = vector.broadcast %cst_101 : f32 to vector<8x32xf32>
    %178 = arith.maximumf %176, %177 : vector<8x32xf32>
    %c5_i32_102 = arith.constant 5 : i32
    %179 = arith.truncf %178 : vector<8x32xf32> to vector<8x32xbf16>
    %cst_103 = arith.constant dense<0.000000e+00> : vector<8x32xf32>
    %180 = tpu.matmul %179, %137, %cst_103 {dimension_numbers = #tpu.dot_dimension_numbers<[1], [0], [0], [1], [0, 0, 1, 1], [], []>} : vector<8x32xbf16>, vector<32x32xbf16>, vector<8x32xf32> -> vector<8x32xf32>
    %181 = arith.index_cast %c5_i32_102 : i32 to index
    %c0_104 = arith.constant 0 : index
    %c0_105 = arith.constant 0 : index
    %182 = vector.load %arg9[%181, %c0_104, %c0_105] : memref<8x8x32xbf16, #tpu.memory_space<vmem>>, vector<1x8x32xbf16>
    %183 = vector.shape_cast %182 : vector<1x8x32xbf16> to vector<8x32xbf16>
    %184 = arith.extf %183 : vector<8x32xbf16> to vector<8x32xf32>
    %185 = arith.addf %184, %180 : vector<8x32xf32>
    %cst_106 = arith.constant 0.000000e+00 : f32
    %186 = vector.broadcast %cst_106 : f32 to vector<8x32xf32>
    %187 = arith.maximumf %185, %186 : vector<8x32xf32>
    %c6_i32_107 = arith.constant 6 : i32
    %188 = arith.truncf %187 : vector<8x32xf32> to vector<8x32xbf16>
    %cst_108 = arith.constant dense<0.000000e+00> : vector<8x32xf32>
    %189 = tpu.matmul %188, %137, %cst_108 {dimension_numbers = #tpu.dot_dimension_numbers<[1], [0], [0], [1], [0, 0, 1, 1], [], []>} : vector<8x32xbf16>, vector<32x32xbf16>, vector<8x32xf32> -> vector<8x32xf32>
    %190 = arith.index_cast %c6_i32_107 : i32 to index
    %c0_109 = arith.constant 0 : index
    %c0_110 = arith.constant 0 : index
    %191 = vector.load %arg9[%190, %c0_109, %c0_110] : memref<8x8x32xbf16, #tpu.memory_space<vmem>>, vector<1x8x32xbf16>
    %192 = vector.shape_cast %191 : vector<1x8x32xbf16> to vector<8x32xbf16>
    %193 = arith.extf %192 : vector<8x32xbf16> to vector<8x32xf32>
    %194 = arith.addf %193, %189 : vector<8x32xf32>
    %cst_111 = arith.constant 0.000000e+00 : f32
    %195 = vector.broadcast %cst_111 : f32 to vector<8x32xf32>
    %196 = arith.maximumf %194, %195 : vector<8x32xf32>
    %c7_i32_112 = arith.constant 7 : i32
    %197 = arith.truncf %196 : vector<8x32xf32> to vector<8x32xbf16>
    %cst_113 = arith.constant dense<0.000000e+00> : vector<8x32xf32>
    %198 = tpu.matmul %197, %137, %cst_113 {dimension_numbers = #tpu.dot_dimension_numbers<[1], [0], [0], [1], [0, 0, 1, 1], [], []>} : vector<8x32xbf16>, vector<32x32xbf16>, vector<8x32xf32> -> vector<8x32xf32>
    %199 = arith.index_cast %c7_i32_112 : i32 to index
    %c0_114 = arith.constant 0 : index
    %c0_115 = arith.constant 0 : index
    %200 = vector.load %arg9[%199, %c0_114, %c0_115] : memref<8x8x32xbf16, #tpu.memory_space<vmem>>, vector<1x8x32xbf16>
    %201 = vector.shape_cast %200 : vector<1x8x32xbf16> to vector<8x32xbf16>
    %202 = arith.extf %201 : vector<8x32xbf16> to vector<8x32xf32>
    %203 = arith.addf %202, %198 : vector<8x32xf32>
    %cst_116 = arith.constant 0.000000e+00 : f32
    %204 = vector.broadcast %cst_116 : f32 to vector<8x32xf32>
    %205 = arith.maximumf %203, %204 : vector<8x32xf32>
    %c7_i32_117 = arith.constant 7 : i32
    %206 = arith.truncf %205 : vector<8x32xf32> to vector<8x32xbf16>
    %c0_118 = arith.constant 0 : index
    %c0_119 = arith.constant 0 : index
    %207 = vector.load %arg6[%c0_118, %c0_119] : memref<32x1xbf16, #tpu.memory_space<vmem>>, vector<32x1xbf16>
    %cst_120 = arith.constant dense<0.000000e+00> : vector<8x1xf32>
    %208 = tpu.matmul %206, %207, %cst_120 {dimension_numbers = #tpu.dot_dimension_numbers<[1], [0], [0], [1], [0, 0, 1, 1], [], []>} : vector<8x32xbf16>, vector<32x1xbf16>, vector<8x1xf32> -> vector<8x1xf32>
    %c0_121 = arith.constant 0 : index
    %c0_122 = arith.constant 0 : index
    %209 = vector.load %arg7[%c0_121, %c0_122] : memref<1x1xf32, #tpu.memory_space<vmem>>, vector<1x1xf32>
    %210 = vector.broadcast %209 : vector<1x1xf32> to vector<8x1xf32>
    %211 = arith.addf %208, %210 : vector<8x1xf32>
    %c0_123 = arith.constant 0 : index
    %c0_124 = arith.constant 0 : index
    %212 = vector.load %arg8[%c0_123, %c0_124] : memref<8x1xf32, #tpu.memory_space<vmem>>, vector<8x1xf32>
    tpu.vector_store %arg8[%c0_123, %c0_124], %211 {strides = array<i32>} : memref<8x1xf32, #tpu.memory_space<vmem>>, vector<8x1xf32>,
    return
  }
  func.func @transform_0(%arg0: i32) -> (i32, i32, i32) {
    %c0_i32 = arith.constant 0 : i32
    %c0_i32_0 = arith.constant 0 : i32
    %c0_i32_1 = arith.constant 0 : i32
    return %c0_i32, %arg0, %c0_i32_0 : i32, i32, i32
  }
  func.func @transform_1(%arg0: i32) -> (i32, i32) {
    %c0_i32 = arith.constant 0 : i32
    %c0_i32_0 = arith.constant 0 : i32
    %c0_i32_1 = arith.constant 0 : i32
    return %c0_i32, %c0_i32_0 : i32, i32
  }
  func.func @transform_2(%arg0: i32) -> (i32, i32, i32) {
    %c0_i32 = arith.constant 0 : i32
    %c0_i32_0 = arith.constant 0 : i32
    %c0_i32_1 = arith.constant 0 : i32
    %c0_i32_2 = arith.constant 0 : i32
    return %c0_i32, %c0_i32_0, %c0_i32_1 : i32, i32, i32
  }
  func.func @transform_3(%arg0: i32) -> (i32, i32, i32) {
    %c0_i32 = arith.constant 0 : i32
    %c0_i32_0 = arith.constant 0 : i32
    %c0_i32_1 = arith.constant 0 : i32
    %c0_i32_2 = arith.constant 0 : i32
    return %c0_i32, %c0_i32_0, %c0_i32_1 : i32, i32, i32
  }
  func.func @transform_4(%arg0: i32) -> (i32, i32, i32) {
    %c0_i32 = arith.constant 0 : i32
    %c0_i32_0 = arith.constant 0 : i32
    %c0_i32_1 = arith.constant 0 : i32
    %c0_i32_2 = arith.constant 0 : i32
    return %c0_i32, %c0_i32_0, %c0_i32_1 : i32, i32, i32
  }
  func.func @transform_5(%arg0: i32) -> (i32, i32) {
    %c0_i32 = arith.constant 0 : i32
    %c0_i32_0 = arith.constant 0 : i32
    %c0_i32_1 = arith.constant 0 : i32
    return %c0_i32, %c0_i32_0 : i32, i32
  }
  func.func @transform_6(%arg0: i32) -> (i32, i32) {
    %c0_i32 = arith.constant 0 : i32
    %c0_i32_0 = arith.constant 0 : i32
    %c0_i32_1 = arith.constant 0 : i32
    return %c0_i32, %c0_i32_0 : i32, i32
  }
  func.func @transform_7(%arg0: i32) -> (i32, i32) {
    %c0_i32 = arith.constant 0 : i32
    %c0_i32_0 = arith.constant 0 : i32
    return %arg0, %c0_i32 : i32, i32
  }
}

</mosaic_0001>

<llo_original>
// kernel: tpu_custom_call.1
$region0: #{tpu_custom_call.1}
  #allocation0 [shape = 'u32[]', space=smem, size = 0x4, offset = 0x4, fixed_abs, tag = 'smem constant byte address 0x4 - core index']
  #allocation1 [shape = 'u32[144,128]{1,0:T(1,128)}', space=vmem, size = 0x12000, scoped, tag = 'internal scratch']
  #allocation2 [shape = 'bf16[8,8,32]{2,1,0:T(8,128)(2,1)}', space=vmem, size = 0x4000, scoped, tag = 'scratch operand']
  #allocation3 [shape = 'f32[1,1]{1,0:T(1,128)S(1)}', space=vmem, size = 0x200, scoped, tag = 'scoped memory for tpu_custom_call.1']
  %s0 = inlined_call_operand.vmem [shape: bf16[8,8,4], index: 0, kind: input, shape index: {}]
  %s1 = inlined_call_operand.vmem [shape: bf16[4,32], index: 1, kind: input, shape index: {}]
  %s2 = inlined_call_operand.vmem [shape: bf16[1,32,32], index: 2, kind: input, shape index: {}]
  %s3 = inlined_call_operand.vmem [shape: bf16[2,32,32], index: 3, kind: input, shape index: {}]
  %s4 = inlined_call_operand.vmem [shape: f32[2,1,32], index: 4, kind: input, shape index: {}]
  %s5 = inlined_call_operand.vmem [shape: bf16[32,1], index: 5, kind: input, shape index: {}]
  %s6 = inlined_call_operand.<no memory space> [shape: f32[1,1], index: 6, kind: input, shape index: {}]
  %s7 = inlined_call_operand.vmem [shape: f32[8,1], index: 7, kind: output, shape index: {}]
  %s8 = sld [smem:[#allocation0]]
  $region38: #{tpu_custom_call.1} parent=0
    _
  %s10 = ssub.s32 1, %s8
  %s11 = scalar_select 0, %s10, %s8
  %v12 = vstv %s6
  %13 = vst [vmem:[#allocation3] sm:$0x1] %v12
  // Predicated region
  $region2: #{tpu_custom_call.1} parent=0 // pred_check
    _
  $region3: #{tpu_custom_call.1} parent=0 // pred_check_branch
    %15 = sbr.rel (0) target = $region5
  $region4: #{tpu_custom_call.1} parent=0 // pred_region
    _
  $region5: #{tpu_custom_call.1} parent=0 // pred_fallthru
    _
  // Predicated region
  $region6: #{tpu_custom_call.1} parent=0 // pred_check
    _
  $region7: #{tpu_custom_call.1} parent=0 // pred_check_branch
    %17 = sbr.rel (0) target = $region9
  $region8: #{tpu_custom_call.1} parent=0 // pred_region
    _
  $region9: #{tpu_custom_call.1} parent=0 // pred_fallthru
    _
  // Predicated region
  $region10: #{tpu_custom_call.1} parent=0 // pred_check
    _
  $region11: #{tpu_custom_call.1} parent=0 // pred_check_branch
    %19 = sbr.rel (0) target = $region13
  $region12: #{tpu_custom_call.1} parent=0 // pred_region
    _
  $region13: #{tpu_custom_call.1} parent=0 // pred_fallthru
    _
  // Predicated region
  $region14: #{tpu_custom_call.1} parent=0 // pred_check
    _
  $region15: #{tpu_custom_call.1} parent=0 // pred_check_branch
    %21 = sbr.rel (0) target = $region17
  $region16: #{tpu_custom_call.1} parent=0 // pred_region
    _
  $region17: #{tpu_custom_call.1} parent=0 // pred_fallthru
    _
  // Predicated region
  $region18: #{tpu_custom_call.1} parent=0 // pred_check
    _
  $region19: #{tpu_custom_call.1} parent=0 // pred_check_branch
    %23 = sbr.rel (0) target = $region21
  $region20: #{tpu_custom_call.1} parent=0 // pred_region
    _
  $region21: #{tpu_custom_call.1} parent=0 // pred_fallthru
    _
  // Predicated region
  $region22: #{tpu_custom_call.1} parent=0 // pred_check
    _
  $region23: #{tpu_custom_call.1} parent=0 // pred_check_branch
    %25 = sbr.rel (0) target = $region25
  $region24: #{tpu_custom_call.1} parent=0 // pred_region
    _
  $region25: #{tpu_custom_call.1} parent=0 // pred_fallthru
    _
  // Predicated region
  $region26: #{tpu_custom_call.1} parent=0 // pred_check
    _
  $region27: #{tpu_custom_call.1} parent=0 // pred_check_branch
    %27 = sbr.rel (0) target = $region29
  $region28: #{tpu_custom_call.1} parent=0 // pred_region
    _
  $region29: #{tpu_custom_call.1} parent=0 // pred_fallthru
    _
  %v29 = vld [vmem:[%s1] sm:$0x3]
  %v30 = vld [vmem:[%s4] sm:$0x1]
  %v31 = vld [vmem:[%s0] sm:$0xf]
  %v32 = vld [vmem:[%s0 + $0x4] sm:$0xf]
  %v33 = vld [vmem:[%s0 + $0x8] sm:$0xf]
  %v34 = vld [vmem:[%s0 + $0xc] sm:$0xf]
  %v35 = vld [vmem:[%s0 + $0x10] sm:$0xf]
  %v36 = vld [vmem:[%s0 + $0x14] sm:$0xf]
  %v37 = vld [vmem:[%s0 + $0x18] sm:$0xf]
  %v38 = vld [vmem:[%s0 + $0x1c] sm:$0xf]
  %v39 = vunpack.c.l.bf16 %v31
  %v40 = vunpack.c.l.bf16 %v32
  %v41 = vunpack.c.l.bf16 %v33
  %v42 = vunpack.c.l.bf16 %v34
  %v43 = vunpack.c.l.bf16 %v35
  %v44 = vunpack.c.l.bf16 %v36
  %v45 = vunpack.c.l.bf16 %v37
  %v46 = vunpack.c.l.bf16 %v38
  %v47 = vpack.c.bf16 %v40, %v39
  %v48 = vpack.c.bf16 %v42, %v41
  %v49 = vpack.c.bf16 %v44, %v43
  %v50 = vpack.c.bf16 %v46, %v45
  %v52 = vlaneseq
  %v53 = vshrl.u32 %v52, 7
  %v54 = vsub.s32 0, %v53
  %v55 = vrot.slane %v30, %v54
  %vm57 = vcmask 31744
  %v59 = vsel %vm57, %v47, 0
  %v62 = vsel %vm57, %v48, 0
  %v65 = vsel %vm57, %v49, 0
  %v68 = vsel %vm57, %v50, 0
  %vm70 = vcmask 1041408
  %v72 = vsel %vm70, %v29, 0
  %74 = vmatprep.subr.bf16.mxu0 0
  %75 = vmatpush1.bf16.msra.mxu0 0
  %76 = vmatprep.subr.bf16.mxu0 0
  %77 = vmatpush1.bf16.msra.mxu0 0
  %78 = vmatprep.subr.bf16.mxu0 0
  %79 = vmatpush1.bf16.msra.mxu0 0
  %80 = vmatprep.subr.bf16.mxu0 0
  %81 = vmatpush1.bf16.msra.mxu0 0
  %82 = vmatprep.subr.bf16.mxu0 0
  %83 = vmatpush1.bf16.msra.mxu0 0
  %84 = vmatprep.subr.bf16.mxu0 0
  %85 = vmatpush1.bf16.msra.mxu0 0
  %86 = vmatprep.subr.bf16.mxu0 0
  %87 = vmatpush1.bf16.msra.mxu0 0
  %88 = vmatprep.subr.bf16.mxu0 0
  %89 = vmatpush1.bf16.msra.mxu0 %v72
  %90 = vmatprep.subr.bf16.mxu0 0
  %91 = vmatpush2.bf16.msra.mxu0 0
  %92 = vmatprep.subr.bf16.mxu0 0
  %93 = vmatpush2.bf16.msra.mxu0 0
  %94 = vmatprep.subr.bf16.mxu0 0
  %95 = vmatpush2.bf16.msra.mxu0 0
  %96 = vmatprep.subr.bf16.mxu0 0
  %97 = vmatpush2.bf16.msra.mxu0 0
  %98 = vmatprep.subr.bf16.mxu0 0
  %99 = vmatpush2.bf16.msra.mxu0 0
  %100 = vmatprep.subr.bf16.mxu0 0
  %101 = vmatpush2.bf16.msra.mxu0 0
  %102 = vmatprep.subr.bf16.mxu0 0
  %103 = vmatpush2.bf16.msra.mxu0 0
  %104 = vmatprep.subr.bf16.mxu0 0
  %105 = vmatpush2.bf16.msra.mxu0 0
  %106 = vmatprep.mubr.bf16.mxu0 0
  %107 = vmatmul.mubr.bf16.gmra.mxu0 %v59
  %v108 = vpop.f32.mrf.mxu0
  %v109 = vadd.f32 %v55, %v108
  %v110 = vpop.f32.mrf.mxu0
  %v111 = vpop.f32.mrf.mxu0
  %v112 = vadd.f32 %v55, %v111
  %v113 = vpop.f32.mrf.mxu0
  %114 = vmatprep.mubr.bf16.mxu0 0
  %115 = vmatmul.mubr.bf16.gmra.mxu0 %v62
  %v116 = vpop.f32.mrf.mxu0
  %v117 = vadd.f32 %v55, %v116
  %v118 = vpop.f32.mrf.mxu0
  %v119 = vpop.f32.mrf.mxu0
  %v120 = vadd.f32 %v55, %v119
  %v121 = vpop.f32.mrf.mxu0
  %122 = vmatprep.mubr.bf16.mxu0 0
  %123 = vmatmul.mubr.bf16.gmra.mxu0 %v65
  %v124 = vpop.f32.mrf.mxu0
  %v125 = vadd.f32 %v55, %v124
  %v126 = vpop.f32.mrf.mxu0
  %v127 = vpop.f32.mrf.mxu0
  %v128 = vadd.f32 %v55, %v127
  %v129 = vpop.f32.mrf.mxu0
  %130 = vmatprep.mubr.bf16.mxu0 0
  %131 = vmatmul.mubr.bf16.gmra.mxu0 %v68
  %v132 = vpop.f32.mrf.mxu0
  %v133 = vadd.f32 %v55, %v132
  %v134 = vpop.f32.mrf.mxu0
  %v135 = vpop.f32.mrf.mxu0
  %v136 = vadd.f32 %v55, %v135
  %v137 = vpop.f32.mrf.mxu0
  %138 = vdwg.mxu0
  %v139 = vpack.c.bf16 %v109, %v109
  %v140 = vpack.c.bf16 %v112, %v112
  %v141 = vpack.c.bf16 %v117, %v117
  %v142 = vpack.c.bf16 %v120, %v120
  %v143 = vpack.c.bf16 %v125, %v125
  %v144 = vpack.c.bf16 %v128, %v128
  %v145 = vpack.c.bf16 %v133, %v133
  %v146 = vpack.c.bf16 %v136, %v136
  %vm147 = vcmask 257024
  %148 = vst.msk [vmem:[#allocation2] sm:$0xf] %vm147, %v139
  %149 = vst.msk [vmem:[#allocation2 + $0x4] sm:$0xf] %vm147, %v140
  %150 = vst.msk [vmem:[#allocation2 + $0x8] sm:$0xf] %vm147, %v141
  %151 = vst.msk [vmem:[#allocation2 + $0xc] sm:$0xf] %vm147, %v142
  %152 = vst.msk [vmem:[#allocation2 + $0x10] sm:$0xf] %vm147, %v143
  %153 = vst.msk [vmem:[#allocation2 + $0x14] sm:$0xf] %vm147, %v144
  %154 = vst.msk [vmem:[#allocation2 + $0x18] sm:$0xf] %vm147, %v145
  %155 = vst.msk [vmem:[#allocation2 + $0x1c] sm:$0xf] %vm147, %v146
  %v156 = vld [vmem:[%s3] sm:$0xf]
  %v157 = vld [vmem:[%s3 + $0x4] sm:$0xf]
  %v158 = vld [vmem:[%s3 + $0x8] sm:$0xf]
  %v159 = vld [vmem:[%s3 + $0xc] sm:$0xf]
  %v160 = vld [vmem:[#allocation2] sm:$0xf]
  %v161 = vunpack.c.l.bf16 %v160
  %v162 = vmax.f32 %v161, 0.0
  %v163 = vpack.c.bf16 %v162, %v162
  %164 = vst.msk [vmem:[#allocation2] sm:$0xf] %vm147, %v163
  %v169 = vunpack.c.l.b16 %v156
  %v170 = vunpack.c.l.b16 %v157
  %v171 = vunpack.c.l.b16 %v158
  %v172 = vunpack.c.l.b16 %v159
  %v173 = vpack.c.b16 %v170, %v169
  %v174 = vpack.c.b16 %v172, %v171
  %vm177 = vcmask 261120
  %v179 = vsel %vm177, %v163, 0
  %181 = vmatprep.subr.bf16.mxu0 0
  %182 = vmatpush1.bf16.msra.mxu0 0
  %183 = vmatprep.subr.bf16.mxu0 0
  %184 = vmatpush1.bf16.msra.mxu0 0
  %185 = vmatprep.subr.bf16.mxu0 0
  %186 = vmatpush1.bf16.msra.mxu0 0
  %187 = vmatprep.subr.bf16.mxu0 0
  %188 = vmatpush1.bf16.msra.mxu0 0
  %189 = vmatprep.subr.bf16.mxu0 0
  %190 = vmatpush1.bf16.msra.mxu0 0
  %191 = vmatprep.subr.bf16.mxu0 0
  %192 = vmatpush1.bf16.msra.mxu0 0
  %193 = vmatprep.subr.bf16.mxu0 0
  %194 = vmatpush1.bf16.msra.mxu0 %v174
  %195 = vmatprep.subr.bf16.mxu0 0
  %196 = vmatpush1.bf16.msra.mxu0 %v173
  %197 = vmatprep.subr.bf16.mxu0 0
  %198 = vmatpush2.bf16.msra.mxu0 0
  %199 = vmatprep.subr.bf16.mxu0 0
  %200 = vmatpush2.bf16.msra.mxu0 0
  %201 = vmatprep.subr.bf16.mxu0 0
  %202 = vmatpush2.bf16.msra.mxu0 0
  %203 = vmatprep.subr.bf16.mxu0 0
  %204 = vmatpush2.bf16.msra.mxu0 0
  %205 = vmatprep.subr.bf16.mxu0 0
  %206 = vmatpush2.bf16.msra.mxu0 0
  %207 = vmatprep.subr.bf16.mxu0 0
  %208 = vmatpush2.bf16.msra.mxu0 0
  %209 = vmatprep.subr.bf16.mxu0 0
  %210 = vmatpush2.bf16.msra.mxu0 0
  %211 = vmatprep.subr.bf16.mxu0 0
  %212 = vmatpush2.bf16.msra.mxu0 0
  %213 = vmatprep.mubr.bf16.mxu0 0
  %214 = vmatmul.mubr.bf16.gmra.mxu0 %v179
  %v215 = vpop.f32.mrf.mxu0
  %v216 = vadd.f32 0.0, %v215
  %v217 = vpop.f32.mrf.mxu0
  %v218 = vpop.f32.mrf.mxu0
  %v219 = vpop.f32.mrf.mxu0
  %220 = vdwg.mxu0
  %s221 = scalar_lea.vmem [#allocation2], 4
  %v222 = vld [vmem:[%s221] sm:$0xf]
  %v223 = vunpack.c.l.bf16 %v222
  %v224 = vadd.f32 %v223, %v216
  %v225 = vmax.f32 %v224, 0.0
  %v226 = vpack.c.bf16 %v225, %v225
  %227 = vst.msk [vmem:[%s221] sm:$0xf] %vm147, %v226
  %v229 = vsel %vm177, %v226, 0
  %231 = vmatprep.subr.bf16.mxu0 0
  %232 = vmatpush1.bf16.msra.mxu0 0
  %233 = vmatprep.subr.bf16.mxu0 0
  %234 = vmatpush1.bf16.msra.mxu0 0
  %235 = vmatprep.subr.bf16.mxu0 0
  %236 = vmatpush1.bf16.msra.mxu0 0
  %237 = vmatprep.subr.bf16.mxu0 0
  %238 = vmatpush1.bf16.msra.mxu0 0
  %239 = vmatprep.subr.bf16.mxu0 0
  %240 = vmatpush1.bf16.msra.mxu0 0
  %241 = vmatprep.subr.bf16.mxu0 0
  %242 = vmatpush1.bf16.msra.mxu0 0
  %243 = vmatprep.subr.bf16.mxu0 0
  %244 = vmatpush1.bf16.msra.mxu0 %v174
  %245 = vmatprep.subr.bf16.mxu0 0
  %246 = vmatpush1.bf16.msra.mxu0 %v173
  %247 = vmatprep.subr.bf16.mxu0 0
  %248 = vmatpush2.bf16.msra.mxu0 0
  %249 = vmatprep.subr.bf16.mxu0 0
  %250 = vmatpush2.bf16.msra.mxu0 0
  %251 = vmatprep.subr.bf16.mxu0 0
  %252 = vmatpush2.bf16.msra.mxu0 0
  %253 = vmatprep.subr.bf16.mxu0 0
  %254 = vmatpush2.bf16.msra.mxu0 0
  %255 = vmatprep.subr.bf16.mxu0 0
  %256 = vmatpush2.bf16.msra.mxu0 0
  %257 = vmatprep.subr.bf16.mxu0 0
  %258 = vmatpush2.bf16.msra.mxu0 0
  %259 = vmatprep.subr.bf16.mxu0 0
  %260 = vmatpush2.bf16.msra.mxu0 0
  %261 = vmatprep.subr.bf16.mxu0 0
  %262 = vmatpush2.bf16.msra.mxu0 0
  %263 = vmatprep.mubr.bf16.mxu0 0
  %264 = vmatmul.mubr.bf16.gmra.mxu0 %v229
  %v265 = vpop.f32.mrf.mxu0
  %v266 = vadd.f32 0.0, %v265
  %v267 = vpop.f32.mrf.mxu0
  %v268 = vpop.f32.mrf.mxu0
  %v269 = vpop.f32.mrf.mxu0
  %270 = vdwg.mxu0
  %s271 = scalar_lea.vmem [#allocation2], 8
  %v272 = vld [vmem:[%s271] sm:$0xf]
  %v273 = vunpack.c.l.bf16 %v272
  %v274 = vadd.f32 %v273, %v266
  %v275 = vmax.f32 %v274, 0.0
  %v276 = vpack.c.bf16 %v275, %v275
  %277 = vst.msk [vmem:[%s271] sm:$0xf] %vm147, %v276
  %v279 = vsel %vm177, %v276, 0
  %281 = vmatprep.subr.bf16.mxu0 0
  %282 = vmatpush1.bf16.msra.mxu0 0
  %283 = vmatprep.subr.bf16.mxu0 0
  %284 = vmatpush1.bf16.msra.mxu0 0
  %285 = vmatprep.subr.bf16.mxu0 0
  %286 = vmatpush1.bf16.msra.mxu0 0
  %287 = vmatprep.subr.bf16.mxu0 0
  %288 = vmatpush1.bf16.msra.mxu0 0
  %289 = vmatprep.subr.bf16.mxu0 0
  %290 = vmatpush1.bf16.msra.mxu0 0
  %291 = vmatprep.subr.bf16.mxu0 0
  %292 = vmatpush1.bf16.msra.mxu0 0
  %293 = vmatprep.subr.bf16.mxu0 0
  %294 = vmatpush1.bf16.msra.mxu0 %v174
  %295 = vmatprep.subr.bf16.mxu0 0
  %296 = vmatpush1.bf16.msra.mxu0 %v173
  %297 = vmatprep.subr.bf16.mxu0 0
  %298 = vmatpush2.bf16.msra.mxu0 0
  %299 = vmatprep.subr.bf16.mxu0 0
  %300 = vmatpush2.bf16.msra.mxu0 0
  %301 = vmatprep.subr.bf16.mxu0 0
  %302 = vmatpush2.bf16.msra.mxu0 0
  %303 = vmatprep.subr.bf16.mxu0 0
  %304 = vmatpush2.bf16.msra.mxu0 0
  %305 = vmatprep.subr.bf16.mxu0 0
  %306 = vmatpush2.bf16.msra.mxu0 0
  %307 = vmatprep.subr.bf16.mxu0 0
  %308 = vmatpush2.bf16.msra.mxu0 0
  %309 = vmatprep.subr.bf16.mxu0 0
  %310 = vmatpush2.bf16.msra.mxu0 0
  %311 = vmatprep.subr.bf16.mxu0 0
  %312 = vmatpush2.bf16.msra.mxu0 0
  %313 = vmatprep.mubr.bf16.mxu0 0
  %314 = vmatmul.mubr.bf16.gmra.mxu0 %v279
  %v315 = vpop.f32.mrf.mxu0
  %v316 = vadd.f32 0.0, %v315
  %v317 = vpop.f32.mrf.mxu0
  %v318 = vpop.f32.mrf.mxu0
  %v319 = vpop.f32.mrf.mxu0
  %320 = vdwg.mxu0
  %s321 = scalar_lea.vmem [#allocation2], 12
  %v322 = vld [vmem:[%s321] sm:$0xf]
  %v323 = vunpack.c.l.bf16 %v322
  %v324 = vadd.f32 %v323, %v316
  %v325 = vmax.f32 %v324, 0.0
  %v326 = vpack.c.bf16 %v325, %v325
  %327 = vst.msk [vmem:[%s321] sm:$0xf] %vm147, %v326
  %v329 = vsel %vm177, %v326, 0
  %331 = vmatprep.subr.bf16.mxu0 0
  %332 = vmatpush1.bf16.msra.mxu0 0
  %333 = vmatprep.subr.bf16.mxu0 0
  %334 = vmatpush1.bf16.msra.mxu0 0
  %335 = vmatprep.subr.bf16.mxu0 0
  %336 = vmatpush1.bf16.msra.mxu0 0
  %337 = vmatprep.subr.bf16.mxu0 0
  %338 = vmatpush1.bf16.msra.mxu0 0
  %339 = vmatprep.subr.bf16.mxu0 0
  %340 = vmatpush1.bf16.msra.mxu0 0
  %341 = vmatprep.subr.bf16.mxu0 0
  %342 = vmatpush1.bf16.msra.mxu0 0
  %343 = vmatprep.subr.bf16.mxu0 0
  %344 = vmatpush1.bf16.msra.mxu0 %v174
  %345 = vmatprep.subr.bf16.mxu0 0
  %346 = vmatpush1.bf16.msra.mxu0 %v173
  %347 = vmatprep.subr.bf16.mxu0 0
  %348 = vmatpush2.bf16.msra.mxu0 0
  %349 = vmatprep.subr.bf16.mxu0 0
  %350 = vmatpush2.bf16.msra.mxu0 0
  %351 = vmatprep.subr.bf16.mxu0 0
  %352 = vmatpush2.bf16.msra.mxu0 0
  %353 = vmatprep.subr.bf16.mxu0 0
  %354 = vmatpush2.bf16.msra.mxu0 0
  %355 = vmatprep.subr.bf16.mxu0 0
  %356 = vmatpush2.bf16.msra.mxu0 0
  %357 = vmatprep.subr.bf16.mxu0 0
  %358 = vmatpush2.bf16.msra.mxu0 0
  %359 = vmatprep.subr.bf16.mxu0 0
  %360 = vmatpush2.bf16.msra.mxu0 0
  %361 = vmatprep.subr.bf16.mxu0 0
  %362 = vmatpush2.bf16.msra.mxu0 0
  %363 = vmatprep.mubr.bf16.mxu0 0
  %364 = vmatmul.mubr.bf16.gmra.mxu0 %v329
  %v365 = vpop.f32.mrf.mxu0
  %v366 = vadd.f32 0.0, %v365
  %v367 = vpop.f32.mrf.mxu0
  %v368 = vpop.f32.mrf.mxu0
  %v369 = vpop.f32.mrf.mxu0
  %370 = vdwg.mxu0
  %s371 = scalar_lea.vmem [#allocation2], 16
  %v372 = vld [vmem:[%s371] sm:$0xf]
  %v373 = vunpack.c.l.bf16 %v372
  %v374 = vadd.f32 %v373, %v366
  %v375 = vmax.f32 %v374, 0.0
  %v376 = vpack.c.bf16 %v375, %v375
  %377 = vst.msk [vmem:[%s371] sm:$0xf] %vm147, %v376
  %v379 = vsel %vm177, %v376, 0
  %381 = vmatprep.subr.bf16.mxu0 0
  %382 = vmatpush1.bf16.msra.mxu0 0
  %383 = vmatprep.subr.bf16.mxu0 0
  %384 = vmatpush1.bf16.msra.mxu0 0
  %385 = vmatprep.subr.bf16.mxu0 0
  %386 = vmatpush1.bf16.msra.mxu0 0
  %387 = vmatprep.subr.bf16.mxu0 0
  %388 = vmatpush1.bf16.msra.mxu0 0
  %389 = vmatprep.subr.bf16.mxu0 0
  %390 = vmatpush1.bf16.msra.mxu0 0
  %391 = vmatprep.subr.bf16.mxu0 0
  %392 = vmatpush1.bf16.msra.mxu0 0
  %393 = vmatprep.subr.bf16.mxu0 0
  %394 = vmatpush1.bf16.msra.mxu0 %v174
  %395 = vmatprep.subr.bf16.mxu0 0
  %396 = vmatpush1.bf16.msra.mxu0 %v173
  %397 = vmatprep.subr.bf16.mxu0 0
  %398 = vmatpush2.bf16.msra.mxu0 0
  %399 = vmatprep.subr.bf16.mxu0 0
  %400 = vmatpush2.bf16.msra.mxu0 0
  %401 = vmatprep.subr.bf16.mxu0 0
  %402 = vmatpush2.bf16.msra.mxu0 0
  %403 = vmatprep.subr.bf16.mxu0 0
  %404 = vmatpush2.bf16.msra.mxu0 0
  %405 = vmatprep.subr.bf16.mxu0 0
  %406 = vmatpush2.bf16.msra.mxu0 0
  %407 = vmatprep.subr.bf16.mxu0 0
  %408 = vmatpush2.bf16.msra.mxu0 0
  %409 = vmatprep.subr.bf16.mxu0 0
  %410 = vmatpush2.bf16.msra.mxu0 0
  %411 = vmatprep.subr.bf16.mxu0 0
  %412 = vmatpush2.bf16.msra.mxu0 0
  %413 = vmatprep.mubr.bf16.mxu0 0
  %414 = vmatmul.mubr.bf16.gmra.mxu0 %v379
  %v415 = vpop.f32.mrf.mxu0
  %v416 = vadd.f32 0.0, %v415
  %v417 = vpop.f32.mrf.mxu0
  %v418 = vpop.f32.mrf.mxu0
  %v419 = vpop.f32.mrf.mxu0
  %420 = vdwg.mxu0
  %s421 = scalar_lea.vmem [#allocation2], 20
  %v422 = vld [vmem:[%s421] sm:$0xf]
  %v423 = vunpack.c.l.bf16 %v422
  %v424 = vadd.f32 %v423, %v416
  %v425 = vmax.f32 %v424, 0.0
  %v426 = vpack.c.bf16 %v425, %v425
  %427 = vst.msk [vmem:[%s421] sm:$0xf] %vm147, %v426
  %v429 = vsel %vm177, %v426, 0
  %431 = vmatprep.subr.bf16.mxu0 0
  %432 = vmatpush1.bf16.msra.mxu0 0
  %433 = vmatprep.subr.bf16.mxu0 0
  %434 = vmatpush1.bf16.msra.mxu0 0
  %435 = vmatprep.subr.bf16.mxu0 0
  %436 = vmatpush1.bf16.msra.mxu0 0
  %437 = vmatprep.subr.bf16.mxu0 0
  %438 = vmatpush1.bf16.msra.mxu0 0
  %439 = vmatprep.subr.bf16.mxu0 0
  %440 = vmatpush1.bf16.msra.mxu0 0
  %441 = vmatprep.subr.bf16.mxu0 0
  %442 = vmatpush1.bf16.msra.mxu0 0
  %443 = vmatprep.subr.bf16.mxu0 0
  %444 = vmatpush1.bf16.msra.mxu0 %v174
  %445 = vmatprep.subr.bf16.mxu0 0
  %446 = vmatpush1.bf16.msra.mxu0 %v173
  %447 = vmatprep.subr.bf16.mxu0 0
  %448 = vmatpush2.bf16.msra.mxu0 0
  %449 = vmatprep.subr.bf16.mxu0 0
  %450 = vmatpush2.bf16.msra.mxu0 0
  %451 = vmatprep.subr.bf16.mxu0 0
  %452 = vmatpush2.bf16.msra.mxu0 0
  %453 = vmatprep.subr.bf16.mxu0 0
  %454 = vmatpush2.bf16.msra.mxu0 0
  %455 = vmatprep.subr.bf16.mxu0 0
  %456 = vmatpush2.bf16.msra.mxu0 0
  %457 = vmatprep.subr.bf16.mxu0 0
  %458 = vmatpush2.bf16.msra.mxu0 0
  %459 = vmatprep.subr.bf16.mxu0 0
  %460 = vmatpush2.bf16.msra.mxu0 0
  %461 = vmatprep.subr.bf16.mxu0 0
  %462 = vmatpush2.bf16.msra.mxu0 0
  %463 = vmatprep.mubr.bf16.mxu0 0
  %464 = vmatmul.mubr.bf16.gmra.mxu0 %v429
  %v465 = vpop.f32.mrf.mxu0
  %v466 = vadd.f32 0.0, %v465
  %v467 = vpop.f32.mrf.mxu0
  %v468 = vpop.f32.mrf.mxu0
  %v469 = vpop.f32.mrf.mxu0
  %470 = vdwg.mxu0
  %s471 = scalar_lea.vmem [#allocation2], 24
  %v472 = vld [vmem:[%s471] sm:$0xf]
  %v473 = vunpack.c.l.bf16 %v472
  %v474 = vadd.f32 %v473, %v466
  %v475 = vmax.f32 %v474, 0.0
  %v476 = vpack.c.bf16 %v475, %v475
  %477 = vst.msk [vmem:[%s471] sm:$0xf] %vm147, %v476
  %v479 = vsel %vm177, %v476, 0
  %481 = vmatprep.subr.bf16.mxu0 0
  %482 = vmatpush1.bf16.msra.mxu0 0
  %483 = vmatprep.subr.bf16.mxu0 0
  %484 = vmatpush1.bf16.msra.mxu0 0
  %485 = vmatprep.subr.bf16.mxu0 0
  %486 = vmatpush1.bf16.msra.mxu0 0
  %487 = vmatprep.subr.bf16.mxu0 0
  %488 = vmatpush1.bf16.msra.mxu0 0
  %489 = vmatprep.subr.bf16.mxu0 0
  %490 = vmatpush1.bf16.msra.mxu0 0
  %491 = vmatprep.subr.bf16.mxu0 0
  %492 = vmatpush1.bf16.msra.mxu0 0
  %493 = vmatprep.subr.bf16.mxu0 0
  %494 = vmatpush1.bf16.msra.mxu0 %v174
  %495 = vmatprep.subr.bf16.mxu0 0
  %496 = vmatpush1.bf16.msra.mxu0 %v173
  %497 = vmatprep.subr.bf16.mxu0 0
  %498 = vmatpush2.bf16.msra.mxu0 0
  %499 = vmatprep.subr.bf16.mxu0 0
  %500 = vmatpush2.bf16.msra.mxu0 0
  %501 = vmatprep.subr.bf16.mxu0 0
  %502 = vmatpush2.bf16.msra.mxu0 0
  %503 = vmatprep.subr.bf16.mxu0 0
  %504 = vmatpush2.bf16.msra.mxu0 0
  %505 = vmatprep.subr.bf16.mxu0 0
  %506 = vmatpush2.bf16.msra.mxu0 0
  %507 = vmatprep.subr.bf16.mxu0 0
  %508 = vmatpush2.bf16.msra.mxu0 0
  %509 = vmatprep.subr.bf16.mxu0 0
  %510 = vmatpush2.bf16.msra.mxu0 0
  %511 = vmatprep.subr.bf16.mxu0 0
  %512 = vmatpush2.bf16.msra.mxu0 0
  %513 = vmatprep.mubr.bf16.mxu0 0
  %514 = vmatmul.mubr.bf16.gmra.mxu0 %v479
  %v515 = vpop.f32.mrf.mxu0
  %v516 = vadd.f32 0.0, %v515
  %v517 = vpop.f32.mrf.mxu0
  %v518 = vpop.f32.mrf.mxu0
  %v519 = vpop.f32.mrf.mxu0
  %520 = vdwg.mxu0
  %s521 = scalar_lea.vmem [#allocation2], 28
  %v522 = vld [vmem:[%s521] sm:$0xf]
  %v523 = vunpack.c.l.bf16 %v522
  %v524 = vadd.f32 %v523, %v516
  %v525 = vmax.f32 %v524, 0.0
  %v526 = vpack.c.bf16 %v525, %v525
  %527 = vst.msk [vmem:[%s521] sm:$0xf] %vm147, %v526
  %v528 = vld [vmem:[%s2] sm:$0xf]
  %v529 = vld [vmem:[%s2 + $0x4] sm:$0xf]
  %v530 = vld [vmem:[%s2 + $0x8] sm:$0xf]
  %v531 = vld [vmem:[%s2 + $0xc] sm:$0xf]
  %s532 = scalar_lea.vmem %s4, 1
  %v533 = vld [vmem:[%s532] sm:$0x1]
  %v534 = vld [vmem:[#allocation2] sm:$0xf]
  %v535 = vld [vmem:[#allocation2 + $0x4] sm:$0xf]
  %v536 = vld [vmem:[#allocation2 + $0x8] sm:$0xf]
  %v537 = vld [vmem:[#allocation2 + $0xc] sm:$0xf]
  %v538 = vld [vmem:[#allocation2 + $0x10] sm:$0xf]
  %v539 = vld [vmem:[#allocation2 + $0x14] sm:$0xf]
  %v540 = vld [vmem:[#allocation2 + $0x18] sm:$0xf]
  %v541 = vld [vmem:[#allocation2 + $0x1c] sm:$0xf]
  %v542 = vunpack.c.l.bf16 %v534
  %v543 = vunpack.c.l.bf16 %v535
  %v544 = vunpack.c.l.bf16 %v536
  %v545 = vunpack.c.l.bf16 %v537
  %v546 = vunpack.c.l.bf16 %v538
  %v547 = vunpack.c.l.bf16 %v539
  %v548 = vunpack.c.l.bf16 %v540
  %v549 = vunpack.c.l.bf16 %v541
  %v550 = vpack.c.bf16 %v543, %v542
  %v551 = vpack.c.bf16 %v545, %v544
  %v552 = vpack.c.bf16 %v547, %v546
  %v553 = vpack.c.bf16 %v549, %v548
  %v555 = vlaneseq
  %v556 = vshrl.u32 %v555, 7
  %v557 = vsub.s32 0, %v556
  %v558 = vrot.slane %v533, %v557
  %v564 = vunpack.c.l.b16 %v528
  %v565 = vunpack.c.l.b16 %v529
  %v566 = vunpack.c.l.b16 %v530
  %v567 = vunpack.c.l.b16 %v531
  %v568 = vpack.c.b16 %v565, %v564
  %v569 = vpack.c.b16 %v567, %v566
  %v573 = vsel %vm177, %v550, 0
  %v576 = vsel %vm177, %v551, 0
  %v579 = vsel %vm177, %v552, 0
  %v582 = vsel %vm177, %v553, 0
  %584 = vmatprep.subr.bf16.mxu0 0
  %585 = vmatpush1.bf16.msra.mxu0 0
  %586 = vmatprep.subr.bf16.mxu0 0
  %587 = vmatpush1.bf16.msra.mxu0 0
  %588 = vmatprep.subr.bf16.mxu0 0
  %589 = vmatpush1.bf16.msra.mxu0 0
  %590 = vmatprep.subr.bf16.mxu0 0
  %591 = vmatpush1.bf16.msra.mxu0 0
  %592 = vmatprep.subr.bf16.mxu0 0
  %593 = vmatpush1.bf16.msra.mxu0 0
  %594 = vmatprep.subr.bf16.mxu0 0
  %595 = vmatpush1.bf16.msra.mxu0 0
  %596 = vmatprep.subr.bf16.mxu0 0
  %597 = vmatpush1.bf16.msra.mxu0 %v569
  %598 = vmatprep.subr.bf16.mxu0 0
  %599 = vmatpush1.bf16.msra.mxu0 %v568
  %600 = vmatprep.subr.bf16.mxu0 0
  %601 = vmatpush2.bf16.msra.mxu0 0
  %602 = vmatprep.subr.bf16.mxu0 0
  %603 = vmatpush2.bf16.msra.mxu0 0
  %604 = vmatprep.subr.bf16.mxu0 0
  %605 = vmatpush2.bf16.msra.mxu0 0
  %606 = vmatprep.subr.bf16.mxu0 0
  %607 = vmatpush2.bf16.msra.mxu0 0
  %608 = vmatprep.subr.bf16.mxu0 0
  %609 = vmatpush2.bf16.msra.mxu0 0
  %610 = vmatprep.subr.bf16.mxu0 0
  %611 = vmatpush2.bf16.msra.mxu0 0
  %612 = vmatprep.subr.bf16.mxu0 0
  %613 = vmatpush2.bf16.msra.mxu0 0
  %614 = vmatprep.subr.bf16.mxu0 0
  %615 = vmatpush2.bf16.msra.mxu0 0
  %616 = vmatprep.mubr.bf16.mxu0 0
  %617 = vmatmul.mubr.bf16.gmra.mxu0 %v573
  %v618 = vpop.f32.mrf.mxu0
  %v619 = vadd.f32 %v558, %v618
  %v620 = vpop.f32.mrf.mxu0
  %v621 = vpop.f32.mrf.mxu0
  %v622 = vadd.f32 %v558, %v621
  %v623 = vpop.f32.mrf.mxu0
  %624 = vmatprep.mubr.bf16.mxu0 0
  %625 = vmatmul.mubr.bf16.gmra.mxu0 %v576
  %v626 = vpop.f32.mrf.mxu0
  %v627 = vadd.f32 %v558, %v626
  %v628 = vpop.f32.mrf.mxu0
  %v629 = vpop.f32.mrf.mxu0
  %v630 = vadd.f32 %v558, %v629
  %v631 = vpop.f32.mrf.mxu0
  %632 = vmatprep.mubr.bf16.mxu0 0
  %633 = vmatmul.mubr.bf16.gmra.mxu0 %v579
  %v634 = vpop.f32.mrf.mxu0
  %v635 = vadd.f32 %v558, %v634
  %v636 = vpop.f32.mrf.mxu0
  %v637 = vpop.f32.mrf.mxu0
  %v638 = vadd.f32 %v558, %v637
  %v639 = vpop.f32.mrf.mxu0
  %640 = vmatprep.mubr.bf16.mxu0 0
  %641 = vmatmul.mubr.bf16.gmra.mxu0 %v582
  %v642 = vpop.f32.mrf.mxu0
  %v643 = vadd.f32 %v558, %v642
  %v644 = vpop.f32.mrf.mxu0
  %v645 = vpop.f32.mrf.mxu0
  %v646 = vadd.f32 %v558, %v645
  %v647 = vpop.f32.mrf.mxu0
  %648 = vdwg.mxu0
  %v649 = vpack.c.bf16 %v619, %v619
  %v650 = vpack.c.bf16 %v622, %v622
  %v651 = vpack.c.bf16 %v627, %v627
  %v652 = vpack.c.bf16 %v630, %v630
  %v653 = vpack.c.bf16 %v635, %v635
  %v654 = vpack.c.bf16 %v638, %v638
  %v655 = vpack.c.bf16 %v643, %v643
  %v656 = vpack.c.bf16 %v646, %v646
  %657 = vst.msk [vmem:[#allocation2] sm:$0xf] %vm147, %v649
  %658 = vst.msk [vmem:[#allocation2 + $0x4] sm:$0xf] %vm147, %v650
  %659 = vst.msk [vmem:[#allocation2 + $0x8] sm:$0xf] %vm147, %v651
  %660 = vst.msk [vmem:[#allocation2 + $0xc] sm:$0xf] %vm147, %v652
  %661 = vst.msk [vmem:[#allocation2 + $0x10] sm:$0xf] %vm147, %v653
  %662 = vst.msk [vmem:[#allocation2 + $0x14] sm:$0xf] %vm147, %v654
  %663 = vst.msk [vmem:[#allocation2 + $0x18] sm:$0xf] %vm147, %v655
  %664 = vst.msk [vmem:[#allocation2 + $0x1c] sm:$0xf] %vm147, %v656
  %s665 = scalar_lea.vmem %s3, 16
  %v666 = vld [vmem:[%s665] sm:$0xf]
  %v667 = vld [vmem:[%s665 + $0x4] sm:$0xf]
  %v668 = vld [vmem:[%s665 + $0x8] sm:$0xf]
  %v669 = vld [vmem:[%s665 + $0xc] sm:$0xf]
  %v670 = vld [vmem:[#allocation2] sm:$0xf]
  %v671 = vunpack.c.l.bf16 %v670
  %v672 = vmax.f32 %v671, 0.0
  %v673 = vpack.c.bf16 %v672, %v672
  %v678 = vunpack.c.l.b16 %v666
  %v679 = vunpack.c.l.b16 %v667
  %v680 = vunpack.c.l.b16 %v668
  %v681 = vunpack.c.l.b16 %v669
  %v682 = vpack.c.b16 %v679, %v678
  %v683 = vpack.c.b16 %v681, %v680
  %v687 = vsel %vm177, %v673, 0
  %689 = vmatprep.subr.bf16.mxu0 0
  %690 = vmatpush1.bf16.msra.mxu0 0
  %691 = vmatprep.subr.bf16.mxu0 0
  %692 = vmatpush1.bf16.msra.mxu0 0
  %693 = vmatprep.subr.bf16.mxu0 0
  %694 = vmatpush1.bf16.msra.mxu0 0
  %695 = vmatprep.subr.bf16.mxu0 0
  %696 = vmatpush1.bf16.msra.mxu0 0
  %697 = vmatprep.subr.bf16.mxu0 0
  %698 = vmatpush1.bf16.msra.mxu0 0
  %699 = vmatprep.subr.bf16.mxu0 0
  %700 = vmatpush1.bf16.msra.mxu0 0
  %701 = vmatprep.subr.bf16.mxu0 0
  %702 = vmatpush1.bf16.msra.mxu0 %v683
  %703 = vmatprep.subr.bf16.mxu0 0
  %704 = vmatpush1.bf16.msra.mxu0 %v682
  %705 = vmatprep.subr.bf16.mxu0 0
  %706 = vmatpush2.bf16.msra.mxu0 0
  %707 = vmatprep.subr.bf16.mxu0 0
  %708 = vmatpush2.bf16.msra.mxu0 0
  %709 = vmatprep.subr.bf16.mxu0 0
  %710 = vmatpush2.bf16.msra.mxu0 0
  %711 = vmatprep.subr.bf16.mxu0 0
  %712 = vmatpush2.bf16.msra.mxu0 0
  %713 = vmatprep.subr.bf16.mxu0 0
  %714 = vmatpush2.bf16.msra.mxu0 0
  %715 = vmatprep.subr.bf16.mxu0 0
  %716 = vmatpush2.bf16.msra.mxu0 0
  %717 = vmatprep.subr.bf16.mxu0 0
  %718 = vmatpush2.bf16.msra.mxu0 0
  %719 = vmatprep.subr.bf16.mxu0 0
  %720 = vmatpush2.bf16.msra.mxu0 0
  %721 = vmatprep.mubr.bf16.mxu0 0
  %722 = vmatmul.mubr.bf16.gmra.mxu0 %v687
  %v723 = vpop.f32.mrf.mxu0
  %v724 = vadd.f32 0.0, %v723
  %v725 = vpop.f32.mrf.mxu0
  %v726 = vpop.f32.mrf.mxu0
  %v727 = vpop.f32.mrf.mxu0
  %728 = vdwg.mxu0
  %v729 = vld [vmem:[%s221] sm:$0xf]
  %v730 = vunpack.c.l.bf16 %v729
  %v731 = vadd.f32 %v730, %v724
  %v732 = vmax.f32 %v731, 0.0
  %v733 = vpack.c.bf16 %v732, %v732
  %v735 = vsel %vm177, %v733, 0
  %737 = vmatprep.subr.bf16.mxu0 0
  %738 = vmatpush1.bf16.msra.mxu0 0
  %739 = vmatprep.subr.bf16.mxu0 0
  %740 = vmatpush1.bf16.msra.mxu0 0
  %741 = vmatprep.subr.bf16.mxu0 0
  %742 = vmatpush1.bf16.msra.mxu0 0
  %743 = vmatprep.subr.bf16.mxu0 0
  %744 = vmatpush1.bf16.msra.mxu0 0
  %745 = vmatprep.subr.bf16.mxu0 0
  %746 = vmatpush1.bf16.msra.mxu0 0
  %747 = vmatprep.subr.bf16.mxu0 0
  %748 = vmatpush1.bf16.msra.mxu0 0
  %749 = vmatprep.subr.bf16.mxu0 0
  %750 = vmatpush1.bf16.msra.mxu0 %v683
  %751 = vmatprep.subr.bf16.mxu0 0
  %752 = vmatpush1.bf16.msra.mxu0 %v682
  %753 = vmatprep.subr.bf16.mxu0 0
  %754 = vmatpush2.bf16.msra.mxu0 0
  %755 = vmatprep.subr.bf16.mxu0 0
  %756 = vmatpush2.bf16.msra.mxu0 0
  %757 = vmatprep.subr.bf16.mxu0 0
  %758 = vmatpush2.bf16.msra.mxu0 0
  %759 = vmatprep.subr.bf16.mxu0 0
  %760 = vmatpush2.bf16.msra.mxu0 0
  %761 = vmatprep.subr.bf16.mxu0 0
  %762 = vmatpush2.bf16.msra.mxu0 0
  %763 = vmatprep.subr.bf16.mxu0 0
  %764 = vmatpush2.bf16.msra.mxu0 0
  %765 = vmatprep.subr.bf16.mxu0 0
  %766 = vmatpush2.bf16.msra.mxu0 0
  %767 = vmatprep.subr.bf16.mxu0 0
  %768 = vmatpush2.bf16.msra.mxu0 0
  %769 = vmatprep.mubr.bf16.mxu0 0
  %770 = vmatmul.mubr.bf16.gmra.mxu0 %v735
  %v771 = vpop.f32.mrf.mxu0
  %v772 = vadd.f32 0.0, %v771
  %v773 = vpop.f32.mrf.mxu0
  %v774 = vpop.f32.mrf.mxu0
  %v775 = vpop.f32.mrf.mxu0
  %776 = vdwg.mxu0
  %v777 = vld [vmem:[%s271] sm:$0xf]
  %v778 = vunpack.c.l.bf16 %v777
  %v779 = vadd.f32 %v778, %v772
  %v780 = vmax.f32 %v779, 0.0
  %v781 = vpack.c.bf16 %v780, %v780
  %v783 = vsel %vm177, %v781, 0
  %785 = vmatprep.subr.bf16.mxu0 0
  %786 = vmatpush1.bf16.msra.mxu0 0
  %787 = vmatprep.subr.bf16.mxu0 0
  %788 = vmatpush1.bf16.msra.mxu0 0
  %789 = vmatprep.subr.bf16.mxu0 0
  %790 = vmatpush1.bf16.msra.mxu0 0
  %791 = vmatprep.subr.bf16.mxu0 0
  %792 = vmatpush1.bf16.msra.mxu0 0
  %793 = vmatprep.subr.bf16.mxu0 0
  %794 = vmatpush1.bf16.msra.mxu0 0
  %795 = vmatprep.subr.bf16.mxu0 0
  %796 = vmatpush1.bf16.msra.mxu0 0
  %797 = vmatprep.subr.bf16.mxu0 0
  %798 = vmatpush1.bf16.msra.mxu0 %v683
  %799 = vmatprep.subr.bf16.mxu0 0
  %800 = vmatpush1.bf16.msra.mxu0 %v682
  %801 = vmatprep.subr.bf16.mxu0 0
  %802 = vmatpush2.bf16.msra.mxu0 0
  %803 = vmatprep.subr.bf16.mxu0 0
  %804 = vmatpush2.bf16.msra.mxu0 0
  %805 = vmatprep.subr.bf16.mxu0 0
  %806 = vmatpush2.bf16.msra.mxu0 0
  %807 = vmatprep.subr.bf16.mxu0 0
  %808 = vmatpush2.bf16.msra.mxu0 0
  %809 = vmatprep.subr.bf16.mxu0 0
  %810 = vmatpush2.bf16.msra.mxu0 0
  %811 = vmatprep.subr.bf16.mxu0 0
  %812 = vmatpush2.bf16.msra.mxu0 0
  %813 = vmatprep.subr.bf16.mxu0 0
  %814 = vmatpush2.bf16.msra.mxu0 0
  %815 = vmatprep.subr.bf16.mxu0 0
  %816 = vmatpush2.bf16.msra.mxu0 0
  %817 = vmatprep.mubr.bf16.mxu0 0
  %818 = vmatmul.mubr.bf16.gmra.mxu0 %v783
  %v819 = vpop.f32.mrf.mxu0
  %v820 = vadd.f32 0.0, %v819
  %v821 = vpop.f32.mrf.mxu0
  %v822 = vpop.f32.mrf.mxu0
  %v823 = vpop.f32.mrf.mxu0
  %824 = vdwg.mxu0
  %v825 = vld [vmem:[%s321] sm:$0xf]
  %v826 = vunpack.c.l.bf16 %v825
  %v827 = vadd.f32 %v826, %v820
  %v828 = vmax.f32 %v827, 0.0
  %v829 = vpack.c.bf16 %v828, %v828
  %v831 = vsel %vm177, %v829, 0
  %833 = vmatprep.subr.bf16.mxu0 0
  %834 = vmatpush1.bf16.msra.mxu0 0
  %835 = vmatprep.subr.bf16.mxu0 0
  %836 = vmatpush1.bf16.msra.mxu0 0
  %837 = vmatprep.subr.bf16.mxu0 0
  %838 = vmatpush1.bf16.msra.mxu0 0
  %839 = vmatprep.subr.bf16.mxu0 0
  %840 = vmatpush1.bf16.msra.mxu0 0
  %841 = vmatprep.subr.bf16.mxu0 0
  %842 = vmatpush1.bf16.msra.mxu0 0
  %843 = vmatprep.subr.bf16.mxu0 0
  %844 = vmatpush1.bf16.msra.mxu0 0
  %845 = vmatprep.subr.bf16.mxu0 0
  %846 = vmatpush1.bf16.msra.mxu0 %v683
  %847 = vmatprep.subr.bf16.mxu0 0
  %848 = vmatpush1.bf16.msra.mxu0 %v682
  %849 = vmatprep.subr.bf16.mxu0 0
  %850 = vmatpush2.bf16.msra.mxu0 0
  %851 = vmatprep.subr.bf16.mxu0 0
  %852 = vmatpush2.bf16.msra.mxu0 0
  %853 = vmatprep.subr.bf16.mxu0 0
  %854 = vmatpush2.bf16.msra.mxu0 0
  %855 = vmatprep.subr.bf16.mxu0 0
  %856 = vmatpush2.bf16.msra.mxu0 0
  %857 = vmatprep.subr.bf16.mxu0 0
  %858 = vmatpush2.bf16.msra.mxu0 0
  %859 = vmatprep.subr.bf16.mxu0 0
  %860 = vmatpush2.bf16.msra.mxu0 0
  %861 = vmatprep.subr.bf16.mxu0 0
  %862 = vmatpush2.bf16.msra.mxu0 0
  %863 = vmatprep.subr.bf16.mxu0 0
  %864 = vmatpush2.bf16.msra.mxu0 0
  %865 = vmatprep.mubr.bf16.mxu0 0
  %866 = vmatmul.mubr.bf16.gmra.mxu0 %v831
  %v867 = vpop.f32.mrf.mxu0
  %v868 = vadd.f32 0.0, %v867
  %v869 = vpop.f32.mrf.mxu0
  %v870 = vpop.f32.mrf.mxu0
  %v871 = vpop.f32.mrf.mxu0
  %872 = vdwg.mxu0
  %v873 = vld [vmem:[%s371] sm:$0xf]
  %v874 = vunpack.c.l.bf16 %v873
  %v875 = vadd.f32 %v874, %v868
  %v876 = vmax.f32 %v875, 0.0
  %v877 = vpack.c.bf16 %v876, %v876
  %v879 = vsel %vm177, %v877, 0
  %881 = vmatprep.subr.bf16.mxu0 0
  %882 = vmatpush1.bf16.msra.mxu0 0
  %883 = vmatprep.subr.bf16.mxu0 0
  %884 = vmatpush1.bf16.msra.mxu0 0
  %885 = vmatprep.subr.bf16.mxu0 0
  %886 = vmatpush1.bf16.msra.mxu0 0
  %887 = vmatprep.subr.bf16.mxu0 0
  %888 = vmatpush1.bf16.msra.mxu0 0
  %889 = vmatprep.subr.bf16.mxu0 0
  %890 = vmatpush1.bf16.msra.mxu0 0
  %891 = vmatprep.subr.bf16.mxu0 0
  %892 = vmatpush1.bf16.msra.mxu0 0
  %893 = vmatprep.subr.bf16.mxu0 0
  %894 = vmatpush1.bf16.msra.mxu0 %v683
  %895 = vmatprep.subr.bf16.mxu0 0
  %896 = vmatpush1.bf16.msra.mxu0 %v682
  %897 = vmatprep.subr.bf16.mxu0 0
  %898 = vmatpush2.bf16.msra.mxu0 0
  %899 = vmatprep.subr.bf16.mxu0 0
  %900 = vmatpush2.bf16.msra.mxu0 0
  %901 = vmatprep.subr.bf16.mxu0 0
  %902 = vmatpush2.bf16.msra.mxu0 0
  %903 = vmatprep.subr.bf16.mxu0 0
  %904 = vmatpush2.bf16.msra.mxu0 0
  %905 = vmatprep.subr.bf16.mxu0 0
  %906 = vmatpush2.bf16.msra.mxu0 0
  %907 = vmatprep.subr.bf16.mxu0 0
  %908 = vmatpush2.bf16.msra.mxu0 0
  %909 = vmatprep.subr.bf16.mxu0 0
  %910 = vmatpush2.bf16.msra.mxu0 0
  %911 = vmatprep.subr.bf16.mxu0 0
  %912 = vmatpush2.bf16.msra.mxu0 0
  %913 = vmatprep.mubr.bf16.mxu0 0
  %914 = vmatmul.mubr.bf16.gmra.mxu0 %v879
  %v915 = vpop.f32.mrf.mxu0
  %v916 = vadd.f32 0.0, %v915
  %v917 = vpop.f32.mrf.mxu0
  %v918 = vpop.f32.mrf.mxu0
  %v919 = vpop.f32.mrf.mxu0
  %920 = vdwg.mxu0
  %v921 = vld [vmem:[%s421] sm:$0xf]
  %v922 = vunpack.c.l.bf16 %v921
  %v923 = vadd.f32 %v922, %v916
  %v924 = vmax.f32 %v923, 0.0
  %v925 = vpack.c.bf16 %v924, %v924
  %v927 = vsel %vm177, %v925, 0
  %929 = vmatprep.subr.bf16.mxu0 0
  %930 = vmatpush1.bf16.msra.mxu0 0
  %931 = vmatprep.subr.bf16.mxu0 0
  %932 = vmatpush1.bf16.msra.mxu0 0
  %933 = vmatprep.subr.bf16.mxu0 0
  %934 = vmatpush1.bf16.msra.mxu0 0
  %935 = vmatprep.subr.bf16.mxu0 0
  %936 = vmatpush1.bf16.msra.mxu0 0
  %937 = vmatprep.subr.bf16.mxu0 0
  %938 = vmatpush1.bf16.msra.mxu0 0
  %939 = vmatprep.subr.bf16.mxu0 0
  %940 = vmatpush1.bf16.msra.mxu0 0
  %941 = vmatprep.subr.bf16.mxu0 0
  %942 = vmatpush1.bf16.msra.mxu0 %v683
  %943 = vmatprep.subr.bf16.mxu0 0
  %944 = vmatpush1.bf16.msra.mxu0 %v682
  %945 = vmatprep.subr.bf16.mxu0 0
  %946 = vmatpush2.bf16.msra.mxu0 0
  %947 = vmatprep.subr.bf16.mxu0 0
  %948 = vmatpush2.bf16.msra.mxu0 0
  %949 = vmatprep.subr.bf16.mxu0 0
  %950 = vmatpush2.bf16.msra.mxu0 0
  %951 = vmatprep.subr.bf16.mxu0 0
  %952 = vmatpush2.bf16.msra.mxu0 0
  %953 = vmatprep.subr.bf16.mxu0 0
  %954 = vmatpush2.bf16.msra.mxu0 0
  %955 = vmatprep.subr.bf16.mxu0 0
  %956 = vmatpush2.bf16.msra.mxu0 0
  %957 = vmatprep.subr.bf16.mxu0 0
  %958 = vmatpush2.bf16.msra.mxu0 0
  %959 = vmatprep.subr.bf16.mxu0 0
  %960 = vmatpush2.bf16.msra.mxu0 0
  %961 = vmatprep.mubr.bf16.mxu0 0
  %962 = vmatmul.mubr.bf16.gmra.mxu0 %v927
  %v963 = vpop.f32.mrf.mxu0
  %v964 = vadd.f32 0.0, %v963
  %v965 = vpop.f32.mrf.mxu0
  %v966 = vpop.f32.mrf.mxu0
  %v967 = vpop.f32.mrf.mxu0
  %968 = vdwg.mxu0
  %v969 = vld [vmem:[%s471] sm:$0xf]
  %v970 = vunpack.c.l.bf16 %v969
  %v971 = vadd.f32 %v970, %v964
  %v972 = vmax.f32 %v971, 0.0
  %v973 = vpack.c.bf16 %v972, %v972
  %v975 = vsel %vm177, %v973, 0
  %977 = vmatprep.subr.bf16.mxu0 0
  %978 = vmatpush1.bf16.msra.mxu0 0
  %979 = vmatprep.subr.bf16.mxu0 0
  %980 = vmatpush1.bf16.msra.mxu0 0
  %981 = vmatprep.subr.bf16.mxu0 0
  %982 = vmatpush1.bf16.msra.mxu0 0
  %983 = vmatprep.subr.bf16.mxu0 0
  %984 = vmatpush1.bf16.msra.mxu0 0
  %985 = vmatprep.subr.bf16.mxu0 0
  %986 = vmatpush1.bf16.msra.mxu0 0
  %987 = vmatprep.subr.bf16.mxu0 0
  %988 = vmatpush1.bf16.msra.mxu0 0
  %989 = vmatprep.subr.bf16.mxu0 0
  %990 = vmatpush1.bf16.msra.mxu0 %v683
  %991 = vmatprep.subr.bf16.mxu0 0
  %992 = vmatpush1.bf16.msra.mxu0 %v682
  %993 = vmatprep.subr.bf16.mxu0 0
  %994 = vmatpush2.bf16.msra.mxu0 0
  %995 = vmatprep.subr.bf16.mxu0 0
  %996 = vmatpush2.bf16.msra.mxu0 0
  %997 = vmatprep.subr.bf16.mxu0 0
  %998 = vmatpush2.bf16.msra.mxu0 0
  %999 = vmatprep.subr.bf16.mxu0 0
  %1000 = vmatpush2.bf16.msra.mxu0 0
  %1001 = vmatprep.subr.bf16.mxu0 0
  %1002 = vmatpush2.bf16.msra.mxu0 0
  %1003 = vmatprep.subr.bf16.mxu0 0
  %1004 = vmatpush2.bf16.msra.mxu0 0
  %1005 = vmatprep.subr.bf16.mxu0 0
  %1006 = vmatpush2.bf16.msra.mxu0 0
  %1007 = vmatprep.subr.bf16.mxu0 0
  %1008 = vmatpush2.bf16.msra.mxu0 0
  %1009 = vmatprep.mubr.bf16.mxu0 0
  %1010 = vmatmul.mubr.bf16.gmra.mxu0 %v975
  %v1011 = vpop.f32.mrf.mxu0
  %v1012 = vadd.f32 0.0, %v1011
  %v1013 = vpop.f32.mrf.mxu0
  %v1014 = vpop.f32.mrf.mxu0
  %v1015 = vpop.f32.mrf.mxu0
  %1016 = vdwg.mxu0
  %v1017 = vld [vmem:[%s521] sm:$0xf]
  %v1018 = vunpack.c.l.bf16 %v1017
  %v1019 = vadd.f32 %v1018, %v1012
  %v1020 = vmax.f32 %v1019, 0.0
  %v1021 = vpack.c.bf16 %v1020, %v1020
  %v1022 = vld [vmem:[%s5] sm:$0xf]
  %v1023 = vld [vmem:[%s5 + $0x4] sm:$0xf]
  %v1024 = vld [vmem:[%s5 + $0x8] sm:$0xf]
  %v1025 = vld [vmem:[%s5 + $0xc] sm:$0xf]
  %v1026 = vld [vmem:[#allocation3] sm:$0x1]
  %v1028 = vlaneseq
  %v1029 = vshrl.u32 %v1028, 7
  %v1030 = vsub.s32 0, %v1029
  %v1031 = vrot.slane %v1026, %v1030
  %v1037 = vunpack.c.l.b16 %v1022
  %v1038 = vunpack.c.l.b16 %v1023
  %v1039 = vunpack.c.l.b16 %v1024
  %v1040 = vunpack.c.l.b16 %v1025
  %v1041 = vpack.c.b16 %v1038, %v1037
  %v1042 = vpack.c.b16 %v1040, %v1039
  %v1046 = vsel %vm177, %v1021, 0
  %1048 = vmatprep.subr.bf16.mxu0 0
  %1049 = vmatpush1.bf16.msra.mxu0 0
  %1050 = vmatprep.subr.bf16.mxu0 0
  %1051 = vmatpush1.bf16.msra.mxu0 0
  %1052 = vmatprep.subr.bf16.mxu0 0
  %1053 = vmatpush1.bf16.msra.mxu0 0
  %1054 = vmatprep.subr.bf16.mxu0 0
  %1055 = vmatpush1.bf16.msra.mxu0 0
  %1056 = vmatprep.subr.bf16.mxu0 0
  %1057 = vmatpush1.bf16.msra.mxu0 0
  %1058 = vmatprep.subr.bf16.mxu0 0
  %1059 = vmatpush1.bf16.msra.mxu0 0
  %1060 = vmatprep.subr.bf16.mxu0 0
  %1061 = vmatpush1.bf16.msra.mxu0 %v1042
  %1062 = vmatprep.subr.bf16.mxu0 0
  %1063 = vmatpush1.bf16.msra.mxu0 %v1041
  %1064 = vmatprep.subr.bf16.mxu0 0
  %1065 = vmatpush2.bf16.msra.mxu0 0
  %1066 = vmatprep.subr.bf16.mxu0 0
  %1067 = vmatpush2.bf16.msra.mxu0 0
  %1068 = vmatprep.subr.bf16.mxu0 0
  %1069 = vmatpush2.bf16.msra.mxu0 0
  %1070 = vmatprep.subr.bf16.mxu0 0
  %1071 = vmatpush2.bf16.msra.mxu0 0
  %1072 = vmatprep.subr.bf16.mxu0 0
  %1073 = vmatpush2.bf16.msra.mxu0 0
  %1074 = vmatprep.subr.bf16.mxu0 0
  %1075 = vmatpush2.bf16.msra.mxu0 0
  %1076 = vmatprep.subr.bf16.mxu0 0
  %1077 = vmatpush2.bf16.msra.mxu0 0
  %1078 = vmatprep.subr.bf16.mxu0 0
  %1079 = vmatpush2.bf16.msra.mxu0 0
  %1080 = vmatprep.mubr.bf16.mxu0 0
  %1081 = vmatmul.mubr.bf16.gmra.mxu0 %v1046
  %v1082 = vpop.f32.mrf.mxu0
  %v1083 = vadd.f32 %v1031, %v1082
  %v1084 = vpop.f32.mrf.mxu0
  %v1085 = vpop.f32.mrf.mxu0
  %v1086 = vpop.f32.mrf.mxu0
  %1087 = vdwg.mxu0
  %vm1088 = vcmask 7168
  %1089 = vst.msk [vmem:[%s7] sm:$0xff] %vm1088, %v1083
  // Predicated region
  $region30: #{tpu_custom_call.1} parent=0 // pred_check
    _
  $region31: #{tpu_custom_call.1} parent=0 // pred_check_branch
    %1091 = sbr.rel (0) target = $region33
  $region32: #{tpu_custom_call.1} parent=0 // pred_region
    _
  $region33: #{tpu_custom_call.1} parent=0 // pred_fallthru
    _
  // Predicated region
  $region34: #{tpu_custom_call.1} parent=0 // pred_check
    _
  $region35: #{tpu_custom_call.1} parent=0 // pred_check_branch
    %1093 = sbr.rel (0) target = $region37
  $region36: #{tpu_custom_call.1} parent=0 // pred_region
    _
  $region37: #{tpu_custom_call.1} parent=0 // pred_fallthru
    _

</llo_original>
